<compile_context>
chip_gen: v6e
topology: v6e:2x2x1
jax: 0.10.0
libtpu: 0.0.40
codegen_flags: <defaults>
</compile_context>

<pallas_src>
import jax
import jax.numpy as jnp
import numpy as np
from jax.experimental import pallas as pl
from jax.experimental.pallas import tpu as pltpu

POS_THRESH = 0.35
NEG_THRESH = 0.1
NEG_POS_RATIO = 3
# TODO(synk): `least_pos_num` is unused in the reference forward(), so it is ignored here.


# ---------------------------------------------------------------------------
# Kernel 1: anchor <-> gt IoU matching, streamed over gt rows
# ---------------------------------------------------------------------------
def _match_kernel(anchors_ref, gt_ref, out_ref):
    """Per (image, anchor-tile): running max-IoU / matched-box / mask rows.

    anchors_ref: (8, tA) VMEM  rows: ax1, ay1, ax2, ay2, area, 0, 0, 0
    gt_ref     : (N, 4*G) SMEM flattened corner boxes (padded rows are zeros)
    out_ref    : (1, 8, tA)    rows: x1, y1, x2, y2, max_iou, pos, neg_cand, 0
    """
    n = pl.program_id(0)
    a = anchors_ref[...]
    ax1 = a[0:1, :]
    ay1 = a[1:2, :]
    ax2 = a[2:3, :]
    ay2 = a[3:4, :]
    area_a = a[4:5, :]

    G = gt_ref.shape[1] // 4
    zeros = jnp.zeros_like(ax1)
    init = (jnp.full_like(ax1, -1.0), zeros, zeros, zeros, zeros)

    def body(g, carry):
        mx, bx1, by1, bx2, by2 = carry
        gx1 = gt_ref[n, 4 * g + 0]          # SMEM scalars, splat over lanes
        gy1 = gt_ref[n, 4 * g + 1]
        gx2 = gt_ref[n, 4 * g + 2]
        gy2 = gt_ref[n, 4 * g + 3]
        iw = jnp.maximum(jnp.minimum(ax2, gx2) - jnp.maximum(ax1, gx1), 0.0)
        ih = jnp.maximum(jnp.minimum(ay2, gy2) - jnp.maximum(ay1, gy1), 0.0)
        inter = iw * ih
        area_g = (gx2 - gx1) * (gy2 - gy1)
        iou = inter / (area_a + area_g - inter + 1e-10)
        take = iou > mx                      # strict '>' == first-argmax tie-break
        return (jnp.where(take, iou, mx),
                jnp.where(take, gx1, bx1),
                jnp.where(take, gy1, by1),
                jnp.where(take, gx2, bx2),
                jnp.where(take, gy2, by2))

    mx, bx1, by1, bx2, by2 = jax.lax.fori_loop(0, G, body, init, unroll=True)

    pos = (mx >= POS_THRESH).astype(jnp.float32)
    negc = (mx < NEG_THRESH).astype(jnp.float32)
    out_ref[...] = jnp.concatenate(
        [bx1, by1, bx2, by2, mx, pos, negc, zeros], axis=0)[None]


# ---------------------------------------------------------------------------
# Kernel 2: box encoding + masked smooth-L1 / cross-entropy partial sums
# ---------------------------------------------------------------------------
def _loss_kernel(packed_ref, match_ref, anchors_ref, out_ref):
    """packed: (1,8,tA) rows dx,dy,dw,dh, conf_bg, conf_fg, sel_neg, 0
       match : (1,8,tA) rows x1,y1,x2,y2, max_iou, pos, neg_cand, 0
       anchors: (8,tA)  rows cx, cy, w, h, 1/w, 1/h, 0, 0
       out   : (1,4) SMEM [loc_sum, loc_cnt, ce_sum, ce_cnt]"""
    p = packed_ref[0]
    m = match_ref[0]
    a = anchors_ref[...]

    pos = m[5:6, :]
    neg = p[6:7, :]

    # ---- 2-class cross entropy (label 1 for positives, 0 for selected negs) ----
    c0 = p[4:5, :]
    c1 = p[5:6, :]
    lse = jnp.maximum(c0, c1) + jnp.log(1.0 + jnp.exp(-jnp.abs(c0 - c1)))
    picked = jnp.where(pos > 0.0, c1 - lse, c0 - lse)
    w = pos + neg                              # disjoint masks
    ce_sum = jnp.sum(-picked * w)
    ce_cnt = jnp.sum(w)

    # ---- box encoding + smooth-L1 over positive anchors ----
    acx = a[0:1, :]
    acy = a[1:2, :]
    inv_w = a[4:5, :]
    inv_h = a[5:6, :]
    gx1 = m[0:1, :]
    gy1 = m[1:2, :]
    gx2 = m[2:3, :]
    gy2 = m[3:4, :]

    box_x = ((gx1 + gx2) * 0.5 - acx) * inv_w
    box_y = ((gy1 + gy2) * 0.5 - acy) * inv_h
    rw = jnp.where(pos > 0.0, (gx2 - gx1) * inv_w, 1.0)   # log(1)=0 on masked lanes
    rh = jnp.where(pos > 0.0, (gy2 - gy1) * inv_h, 1.0)
    box_w = jnp.log(rw)
    box_h = jnp.log(rh)

    def smooth_l1(d):
        ad = jnp.abs(d)
        return jnp.where(ad < 1.0, 0.5 * d * d, ad - 0.5)

    sl1 = (smooth_l1(p[0:1, :] - box_x) + smooth_l1(p[1:2, :] - box_y)
           + smooth_l1(p[2:3, :] - box_w) + smooth_l1(p[3:4, :] - box_h))
    sl1 = jnp.where(pos > 0.0, sl1, 0.0)      # masked lanes contribute exactly 0
    loc_sum = jnp.sum(sl1)
    loc_cnt = jnp.sum(pos) * 4.0              # mean over num_pos * 4 elements

    out_ref[0, 0] = loc_sum
    out_ref[0, 1] = loc_cnt
    out_ref[0, 2] = ce_sum
    out_ref[0, 3] = ce_cnt


def _anchor_tile(A, max_tile):
    """Largest multiple-of-128 divisor of A that is <= max_tile (else whole A)."""
    if A <= max_tile:
        return A
    t = (max_tile // 128) * 128
    while t >= 128:
        if A % t == 0:
            return t
        t -= 128
    # TODO(synk): A not a multiple of 128 -> fall back to one full-width tile.
    return A


# ---------------------------------------------------------------------------
# Wrapper (glue in plain JAX)
# ---------------------------------------------------------------------------
def multibox_loss(loc, conf, anchors, gt_boxes, gt_valid=None):
    N, A, C = conf.shape
    G = gt_boxes.shape[1]

    # Padded gt rows must be all-zero boxes: their IoU with any positive-size
    # anchor is exactly 0, so they can never create a positive match nor
    # displace the first-argmax for a positive anchor.
    if gt_valid is not None:
        gt_boxes = gt_boxes * gt_valid

    acx = anchors[:, 0]
    acy = anchors[:, 1]
    aw = anchors[:, 2]
    ah = anchors[:, 3]
    zA = jnp.zeros((A,), jnp.float32)
    # Dense 8-row anchor slabs (A in lanes); reciprocals precomputed so the
    # loss kernel uses multiplies instead of EUP divides.
    anchors_iou = jnp.stack([acx - aw * 0.5, acy - ah * 0.5,
                             acx + aw * 0.5, acy + ah * 0.5,
                             aw * ah, zA, zA, zA], axis=0).astype(jnp.float32)
    anchors_enc = jnp.stack([acx, acy, aw, ah, 1.0 / aw, 1.0 / ah, zA, zA],
                            axis=0).astype(jnp.float32)

    gt_flat = gt_boxes.reshape(N, G * 4).astype(jnp.float32)

    # ---- Kernel 1: matching ----
    ta1 = _anchor_tile(A, 512)
    nt1 = A // ta1
    match = pl.pallas_call(
        _match_kernel,
        out_shape=jax.ShapeDtypeStruct((N, 8, A), jnp.float32),
        grid=(N, nt1),
        in_specs=[pl.BlockSpec((8, ta1), lambda n, t: (0, t)),
                  pl.BlockSpec(memory_space=pltpu.MemorySpace.SMEM)],
        out_specs=pl.BlockSpec((1, 8, ta1), lambda n, t: (n, 0, t)),
        compiler_params=pltpu.CompilerParams(
            dimension_semantics=("parallel", "parallel")),
    )(anchors_iou, gt_flat)

    # ---- Hard-negative mining (data-dependent top-k stays in XLA glue) ----
    pos_f = match[:, 5, :]                                    # (N, A) 0/1
    neg_cand = match[:, 6, :] > 0.0
    num_pos = jnp.sum(pos_f, axis=1)
    neg_num = (num_pos * NEG_POS_RATIO).astype(jnp.int32)

    bg = conf[:, :, 0]
    masked_scores = jnp.where(neg_cand, bg, jnp.inf)
    order = jnp.argsort(masked_scores, axis=1)                # stable sort
    iota = jnp.broadcast_to(jnp.arange(A, dtype=jnp.int32), (N, A))
    rows = jnp.broadcast_to(jnp.arange(N, dtype=jnp.int32)[:, None], (N, A))
    rank = jnp.zeros((N, A), jnp.int32).at[rows, order].set(iota)
    sel_neg = neg_cand & (rank < neg_num[:, None])

    # ---- Pack kernel-2 per-image inputs into one dense 8-row slab ----
    # TODO(synk): only the 2-class (background / object) case of the module is handled.
    loc_t = jnp.transpose(loc, (0, 2, 1)).astype(jnp.float32)               # (N,4,A)
    conf_t = jnp.transpose(conf[:, :, :2], (0, 2, 1)).astype(jnp.float32)   # (N,2,A)
    packed = jnp.concatenate(
        [loc_t, conf_t, sel_neg.astype(jnp.float32)[:, None, :],
         jnp.zeros((N, 1, A), jnp.float32)], axis=1)                        # (N,8,A)

    # ---- Kernel 2: masked losses, tiled over A ----
    ta2 = _anchor_tile(A, 1024)
    nt2 = A // ta2
    parts = pl.pallas_call(
        _loss_kernel,
        out_shape=jax.ShapeDtypeStruct((N * nt2, 4), jnp.float32),
        grid=(N, nt2),
        in_specs=[pl.BlockSpec((1, 8, ta2), lambda n, t: (n, 0, t)),
                  pl.BlockSpec((1, 8, ta2), lambda n, t: (n, 0, t)),
                  pl.BlockSpec((8, ta2), lambda n, t: (0, t))],
        out_specs=pl.BlockSpec((1, 4), lambda n, t: (n * nt2 + t, 0),
                               memory_space=pltpu.MemorySpace.SMEM),
        compiler_params=pltpu.CompilerParams(
            dimension_semantics=("parallel", "parallel")),
    )(packed, match, anchors_enc)

    totals = jnp.sum(parts, axis=0)                           # (4,)
    # TODO(synk): PyTorch returns (None, None) when no image has positives; static
    # shapes force returning 0.0 losses in that case instead.
    loss_loc = totals[0] / jnp.maximum(totals[1], 1.0)
    loss_conf = totals[2] / jnp.maximum(totals[3], 1.0)
    return loss_loc, loss_conf


# ---------------------------------------------------------------------------
# Pure-JAX reference (same matching semantics) for validation
# ---------------------------------------------------------------------------
def reference_loss(loc, conf, anchors, gt_boxes, gt_valid):
    N, A, _ = loc.shape
    ax1 = anchors[:, 0] - anchors[:, 2] / 2
    ay1 = anchors[:, 1] - anchors[:, 3] / 2
    ax2 = anchors[:, 0] + anchors[:, 2] / 2
    ay2 = anchors[:, 1] + anchors[:, 3] / 2
    gx1, gy1, gx2, gy2 = [gt_boxes[:, :, i:i + 1] for i in range(4)]   # (N,G,1)
    iw = jnp.maximum(jnp.minimum(ax2, gx2) - jnp.maximum(ax1, gx1), 0.0)
    ih = jnp.maximum(jnp.minimum(ay2, gy2) - jnp.maximum(ay1, gy1), 0.0)
    inter = iw * ih
    union = anchors[:, 2] * anchors[:, 3] + (gx2 - gx1) * (gy2 - gy1) - inter
    iou = inter / (union + 1e-10)
    iou = jnp.where(gt_valid > 0.0, iou, -1.0)                         # (N,G,A)
    max_iou = iou.max(axis=1)
    best = jnp.argmax(iou, axis=1)

    pos = max_iou >= POS_THRESH
    negm = max_iou < NEG_THRESH
    neg_num = pos.sum(axis=1) * NEG_POS_RATIO
    rank = jnp.argsort(jnp.argsort(jnp.where(negm, conf[:, :, 0], jnp.inf), axis=1), axis=1)
    sel = negm & (rank < neg_num[:, None])
    matched = jnp.take_along_axis(
        gt_boxes, jnp.broadcast_to(best[:, :, None], (N, A, 4)), axis=1)

    acxy, awh = anchors[None, :, :2], anchors[None, :, 2:]
    bxy = ((matched[:, :, :2] + matched[:, :, 2:]) / 2 - acxy) / awh
    wh = matched[:, :, 2:] - matched[:, :, :2]
    bwh = jnp.log(jnp.where(pos[..., None], wh, awh) / awh)
    enc = jnp.concatenate([bxy, bwh], axis=-1)
    d = loc - enc
    ad = jnp.abs(d)
    sl1 = jnp.where(ad < 1.0, 0.5 * d * d, ad - 0.5)
    posf = pos.astype(jnp.float32)[..., None]
    loss_loc = (sl1 * posf).sum() / jnp.maximum(posf.sum() * 4.0, 1.0)

    logp = jax.nn.log_softmax(conf, axis=-1)
    picked = jnp.where(pos, logp[:, :, 1], logp[:, :, 0])
    w = posf[..., 0] + sel.astype(jnp.float32)
    loss_conf = (-picked * w).sum() / jnp.maximum(w.sum(), 1.0)
    return loss_loc, loss_conf


if __name__ == "__main__":
    key = jax.random.PRNGKey(0)
    N, A_side, G, C = 2, 16, 8, 2
    A = A_side * A_side

    # anchors: 16x16 grid of centers, fixed 0.1x0.1 size (center form)
    xs = (jnp.arange(A_side, dtype=jnp.float32) + 0.5) / A_side
    cy, cx = jnp.meshgrid(xs, xs, indexing="ij")
    anchors = jnp.stack([cx.ravel(), cy.ravel(),
                         jnp.full((A,), 0.1, jnp.float32),
                         jnp.full((A,), 0.1, jnp.float32)], axis=1)

    counts = [3, 5]
    k_loc, k_conf, k0, k1 = jax.random.split(key, 4)
    gt_boxes = jnp.zeros((N, G, 4), jnp.float32)
    for n, (cnt, kk) in enumerate(zip(counts, [k0, k1])):
        idx = jax.random.choice(kk, A, shape=(cnt,), replace=False)
        ctr = anchors[idx, :2]
        boxes = jnp.concatenate([ctr - 0.06, ctr + 0.06], axis=1)  # corner form
        gt_boxes = gt_boxes.at[n, :cnt].set(boxes)
    gt_valid = (jnp.arange(G)[None, :] < jnp.array(counts)[:, None]
                ).astype(jnp.float32)[..., None]                    # (N, G, 1)

    loc = 0.1 * jax.random.normal(k_loc, (N, A, 4), jnp.float32)
    conf = jax.random.normal(k_conf, (N, A, C), jnp.float32)

    loss_loc, loss_conf = multibox_loss(loc, conf, anchors, gt_boxes, gt_valid)
    jax.block_until_ready((loss_loc, loss_conf))

    ref_loc, ref_conf = reference_loss(loc, conf, anchors, gt_boxes, gt_valid)
    np.testing.assert_allclose(np.asarray(loss_loc), np.asarray(ref_loc),
                               rtol=1e-4, atol=1e-5)
    np.testing.assert_allclose(np.asarray(loss_conf), np.asarray(ref_conf),
                               rtol=1e-4, atol=1e-5)
    assert np.isfinite(np.asarray(loss_loc)) and np.isfinite(np.asarray(loss_conf))
    print("KERNEL_OK")
</pallas_src>

<mosaic_0001>
module attributes {stable_mosaic.version = 11 : i64} {
  func.func @_match_kernel(%arg0: i32, %arg1: i32, %arg2: memref<8x256xf32, #tpu.memory_space<vmem>>, %arg3: memref<2x32xf32, #tpu.memory_space<smem>>, %arg4: memref<1x8x256xf32, #tpu.memory_space<vmem>>) attributes {dimension_semantics = [#tpu.dimension_semantics<parallel>, #tpu.dimension_semantics<parallel>], iteration_bounds = array<i64: 2, 1>, scalar_prefetch = 0 : i64, scratch_operands = 0 : i64, tpu.core_type = #tpu.core_type<tc>, window_params = [{transform_indices = @transform_0, window_bounds = array<i64: 8, 256>}, {transform_indices = @transform_1, window_bounds = array<i64: 2, 32>}, {transform_indices = @transform_2, window_bounds = array<i64: 1, 8, 256>}]} {
    %c0 = arith.constant 0 : index
    %c0_0 = arith.constant 0 : index
    %0 = vector.load %arg2[%c0, %c0_0] : memref<8x256xf32, #tpu.memory_space<vmem>>, vector<8x256xf32>
    %1 = vector.extract_strided_slice %0 {offsets = [0, 0], sizes = [1, 256], strides = [1, 1]} : vector<8x256xf32> to vector<1x256xf32>
    %2 = vector.extract_strided_slice %0 {offsets = [1, 0], sizes = [1, 256], strides = [1, 1]} : vector<8x256xf32> to vector<1x256xf32>
    %3 = vector.extract_strided_slice %0 {offsets = [2, 0], sizes = [1, 256], strides = [1, 1]} : vector<8x256xf32> to vector<1x256xf32>
    %4 = vector.extract_strided_slice %0 {offsets = [3, 0], sizes = [1, 256], strides = [1, 1]} : vector<8x256xf32> to vector<1x256xf32>
    %5 = vector.extract_strided_slice %0 {offsets = [4, 0], sizes = [1, 256], strides = [1, 1]} : vector<8x256xf32> to vector<1x256xf32>
    %cst = arith.constant 0.000000e+00 : f32
    %6 = vector.broadcast %cst : f32 to vector<1x256xf32>
    %cst_1 = arith.constant -1.000000e+00 : f32
    %7 = vector.broadcast %cst_1 : f32 to vector<1x256xf32>
    %c0_i32 = arith.constant 0 : i32
    %c4_i32 = arith.constant 4 : i32
    %8 = arith.muli %c4_i32, %c0_i32 : i32
    %c0_i32_2 = arith.constant 0 : i32
    %9 = arith.addi %8, %c0_i32_2 : i32
    %10 = arith.index_cast %arg0 : i32 to index
    %11 = arith.index_cast %9 : i32 to index
    %12 = memref.load %arg3[%10, %11] : memref<2x32xf32, #tpu.memory_space<smem>>
    %c4_i32_3 = arith.constant 4 : i32
    %13 = arith.muli %c4_i32_3, %c0_i32 : i32
    %c1_i32 = arith.constant 1 : i32
    %14 = arith.addi %13, %c1_i32 : i32
    %15 = arith.index_cast %arg0 : i32 to index
    %16 = arith.index_cast %14 : i32 to index
    %17 = memref.load %arg3[%15, %16] : memref<2x32xf32, #tpu.memory_space<smem>>
    %c4_i32_4 = arith.constant 4 : i32
    %18 = arith.muli %c4_i32_4, %c0_i32 : i32
    %c2_i32 = arith.constant 2 : i32
    %19 = arith.addi %18, %c2_i32 : i32
    %20 = arith.index_cast %arg0 : i32 to index
    %21 = arith.index_cast %19 : i32 to index
    %22 = memref.load %arg3[%20, %21] : memref<2x32xf32, #tpu.memory_space<smem>>
    %c4_i32_5 = arith.constant 4 : i32
    %23 = arith.muli %c4_i32_5, %c0_i32 : i32
    %c3_i32 = arith.constant 3 : i32
    %24 = arith.addi %23, %c3_i32 : i32
    %25 = arith.index_cast %arg0 : i32 to index
    %26 = arith.index_cast %24 : i32 to index
    %27 = memref.load %arg3[%25, %26] : memref<2x32xf32, #tpu.memory_space<smem>>
    %28 = vector.broadcast %22 : f32 to vector<1x256xf32>
    %29 = arith.minimumf %3, %28 : vector<1x256xf32>
    %30 = vector.broadcast %12 : f32 to vector<1x256xf32>
    %31 = arith.maximumf %1, %30 : vector<1x256xf32>
    %32 = arith.subf %29, %31 : vector<1x256xf32>
    %cst_6 = arith.constant 0.000000e+00 : f32
    %33 = vector.broadcast %cst_6 : f32 to vector<1x256xf32>
    %34 = arith.maximumf %32, %33 : vector<1x256xf32>
    %35 = vector.broadcast %27 : f32 to vector<1x256xf32>
    %36 = arith.minimumf %4, %35 : vector<1x256xf32>
    %37 = vector.broadcast %17 : f32 to vector<1x256xf32>
    %38 = arith.maximumf %2, %37 : vector<1x256xf32>
    %39 = arith.subf %36, %38 : vector<1x256xf32>
    %cst_7 = arith.constant 0.000000e+00 : f32
    %40 = vector.broadcast %cst_7 : f32 to vector<1x256xf32>
    %41 = arith.maximumf %39, %40 : vector<1x256xf32>
    %42 = arith.mulf %34, %41 : vector<1x256xf32>
    %43 = arith.subf %22, %12 : f32
    %44 = arith.subf %27, %17 : f32
    %45 = arith.mulf %43, %44 : f32
    %46 = vector.broadcast %45 : f32 to vector<1x256xf32>
    %47 = arith.addf %5, %46 : vector<1x256xf32>
    %48 = arith.subf %47, %42 : vector<1x256xf32>
    %cst_8 = arith.constant 1.000000e-10 : f32
    %49 = vector.broadcast %cst_8 : f32 to vector<1x256xf32>
    %50 = arith.addf %48, %49 : vector<1x256xf32>
    %51 = arith.divf %42, %50 : vector<1x256xf32>
    %52 = arith.cmpf ogt, %51, %7 : vector<1x256xf32>
    %53 = arith.select %52, %51, %7 : vector<1x256xi1>, vector<1x256xf32>
    %54 = vector.broadcast %12 : f32 to vector<1x256xf32>
    %55 = arith.select %52, %54, %6 : vector<1x256xi1>, vector<1x256xf32>
    %56 = vector.broadcast %17 : f32 to vector<1x256xf32>
    %57 = arith.select %52, %56, %6 : vector<1x256xi1>, vector<1x256xf32>
    %58 = vector.broadcast %22 : f32 to vector<1x256xf32>
    %59 = arith.select %52, %58, %6 : vector<1x256xi1>, vector<1x256xf32>
    %60 = vector.broadcast %27 : f32 to vector<1x256xf32>
    %61 = arith.select %52, %60, %6 : vector<1x256xi1>, vector<1x256xf32>
    %c1_i32_9 = arith.constant 1 : i32
    %c4_i32_10 = arith.constant 4 : i32
    %62 = arith.muli %c4_i32_10, %c1_i32_9 : i32
    %c0_i32_11 = arith.constant 0 : i32
    %63 = arith.addi %62, %c0_i32_11 : i32
    %64 = arith.index_cast %arg0 : i32 to index
    %65 = arith.index_cast %63 : i32 to index
    %66 = memref.load %arg3[%64, %65] : memref<2x32xf32, #tpu.memory_space<smem>>
    %c4_i32_12 = arith.constant 4 : i32
    %67 = arith.muli %c4_i32_12, %c1_i32_9 : i32
    %c1_i32_13 = arith.constant 1 : i32
    %68 = arith.addi %67, %c1_i32_13 : i32
    %69 = arith.index_cast %arg0 : i32 to index
    %70 = arith.index_cast %68 : i32 to index
    %71 = memref.load %arg3[%69, %70] : memref<2x32xf32, #tpu.memory_space<smem>>
    %c4_i32_14 = arith.constant 4 : i32
    %72 = arith.muli %c4_i32_14, %c1_i32_9 : i32
    %c2_i32_15 = arith.constant 2 : i32
    %73 = arith.addi %72, %c2_i32_15 : i32
    %74 = arith.index_cast %arg0 : i32 to index
    %75 = arith.index_cast %73 : i32 to index
    %76 = memref.load %arg3[%74, %75] : memref<2x32xf32, #tpu.memory_space<smem>>
    %c4_i32_16 = arith.constant 4 : i32
    %77 = arith.muli %c4_i32_16, %c1_i32_9 : i32
    %c3_i32_17 = arith.constant 3 : i32
    %78 = arith.addi %77, %c3_i32_17 : i32
    %79 = arith.index_cast %arg0 : i32 to index
    %80 = arith.index_cast %78 : i32 to index
    %81 = memref.load %arg3[%79, %80] : memref<2x32xf32, #tpu.memory_space<smem>>
    %82 = vector.broadcast %76 : f32 to vector<1x256xf32>
    %83 = arith.minimumf %3, %82 : vector<1x256xf32>
    %84 = vector.broadcast %66 : f32 to vector<1x256xf32>
    %85 = arith.maximumf %1, %84 : vector<1x256xf32>
    %86 = arith.subf %83, %85 : vector<1x256xf32>
    %cst_18 = arith.constant 0.000000e+00 : f32
    %87 = vector.broadcast %cst_18 : f32 to vector<1x256xf32>
    %88 = arith.maximumf %86, %87 : vector<1x256xf32>
    %89 = vector.broadcast %81 : f32 to vector<1x256xf32>
    %90 = arith.minimumf %4, %89 : vector<1x256xf32>
    %91 = vector.broadcast %71 : f32 to vector<1x256xf32>
    %92 = arith.maximumf %2, %91 : vector<1x256xf32>
    %93 = arith.subf %90, %92 : vector<1x256xf32>
    %cst_19 = arith.constant 0.000000e+00 : f32
    %94 = vector.broadcast %cst_19 : f32 to vector<1x256xf32>
    %95 = arith.maximumf %93, %94 : vector<1x256xf32>
    %96 = arith.mulf %88, %95 : vector<1x256xf32>
    %97 = arith.subf %76, %66 : f32
    %98 = arith.subf %81, %71 : f32
    %99 = arith.mulf %97, %98 : f32
    %100 = vector.broadcast %99 : f32 to vector<1x256xf32>
    %101 = arith.addf %5, %100 : vector<1x256xf32>
    %102 = arith.subf %101, %96 : vector<1x256xf32>
    %cst_20 = arith.constant 1.000000e-10 : f32
    %103 = vector.broadcast %cst_20 : f32 to vector<1x256xf32>
    %104 = arith.addf %102, %103 : vector<1x256xf32>
    %105 = arith.divf %96, %104 : vector<1x256xf32>
    %106 = arith.cmpf ogt, %105, %53 : vector<1x256xf32>
    %107 = arith.select %106, %105, %53 : vector<1x256xi1>, vector<1x256xf32>
    %108 = vector.broadcast %66 : f32 to vector<1x256xf32>
    %109 = arith.select %106, %108, %55 : vector<1x256xi1>, vector<1x256xf32>
    %110 = vector.broadcast %71 : f32 to vector<1x256xf32>
    %111 = arith.select %106, %110, %57 : vector<1x256xi1>, vector<1x256xf32>
    %112 = vector.broadcast %76 : f32 to vector<1x256xf32>
    %113 = arith.select %106, %112, %59 : vector<1x256xi1>, vector<1x256xf32>
    %114 = vector.broadcast %81 : f32 to vector<1x256xf32>
    %115 = arith.select %106, %114, %61 : vector<1x256xi1>, vector<1x256xf32>
    %c2_i32_21 = arith.constant 2 : i32
    %c4_i32_22 = arith.constant 4 : i32
    %116 = arith.muli %c4_i32_22, %c2_i32_21 : i32
    %c0_i32_23 = arith.constant 0 : i32
    %117 = arith.addi %116, %c0_i32_23 : i32
    %118 = arith.index_cast %arg0 : i32 to index
    %119 = arith.index_cast %117 : i32 to index
    %120 = memref.load %arg3[%118, %119] : memref<2x32xf32, #tpu.memory_space<smem>>
    %c4_i32_24 = arith.constant 4 : i32
    %121 = arith.muli %c4_i32_24, %c2_i32_21 : i32
    %c1_i32_25 = arith.constant 1 : i32
    %122 = arith.addi %121, %c1_i32_25 : i32
    %123 = arith.index_cast %arg0 : i32 to index
    %124 = arith.index_cast %122 : i32 to index
    %125 = memref.load %arg3[%123, %124] : memref<2x32xf32, #tpu.memory_space<smem>>
    %c4_i32_26 = arith.constant 4 : i32
    %126 = arith.muli %c4_i32_26, %c2_i32_21 : i32
    %c2_i32_27 = arith.constant 2 : i32
    %127 = arith.addi %126, %c2_i32_27 : i32
    %128 = arith.index_cast %arg0 : i32 to index
    %129 = arith.index_cast %127 : i32 to index
    %130 = memref.load %arg3[%128, %129] : memref<2x32xf32, #tpu.memory_space<smem>>
    %c4_i32_28 = arith.constant 4 : i32
    %131 = arith.muli %c4_i32_28, %c2_i32_21 : i32
    %c3_i32_29 = arith.constant 3 : i32
    %132 = arith.addi %131, %c3_i32_29 : i32
    %133 = arith.index_cast %arg0 : i32 to index
    %134 = arith.index_cast %132 : i32 to index
    %135 = memref.load %arg3[%133, %134] : memref<2x32xf32, #tpu.memory_space<smem>>
    %136 = vector.broadcast %130 : f32 to vector<1x256xf32>
    %137 = arith.minimumf %3, %136 : vector<1x256xf32>
    %138 = vector.broadcast %120 : f32 to vector<1x256xf32>
    %139 = arith.maximumf %1, %138 : vector<1x256xf32>
    %140 = arith.subf %137, %139 : vector<1x256xf32>
    %cst_30 = arith.constant 0.000000e+00 : f32
    %141 = vector.broadcast %cst_30 : f32 to vector<1x256xf32>
    %142 = arith.maximumf %140, %141 : vector<1x256xf32>
    %143 = vector.broadcast %135 : f32 to vector<1x256xf32>
    %144 = arith.minimumf %4, %143 : vector<1x256xf32>
    %145 = vector.broadcast %125 : f32 to vector<1x256xf32>
    %146 = arith.maximumf %2, %145 : vector<1x256xf32>
    %147 = arith.subf %144, %146 : vector<1x256xf32>
    %cst_31 = arith.constant 0.000000e+00 : f32
    %148 = vector.broadcast %cst_31 : f32 to vector<1x256xf32>
    %149 = arith.maximumf %147, %148 : vector<1x256xf32>
    %150 = arith.mulf %142, %149 : vector<1x256xf32>
    %151 = arith.subf %130, %120 : f32
    %152 = arith.subf %135, %125 : f32
    %153 = arith.mulf %151, %152 : f32
    %154 = vector.broadcast %153 : f32 to vector<1x256xf32>
    %155 = arith.addf %5, %154 : vector<1x256xf32>
    %156 = arith.subf %155, %150 : vector<1x256xf32>
    %cst_32 = arith.constant 1.000000e-10 : f32
    %157 = vector.broadcast %cst_32 : f32 to vector<1x256xf32>
    %158 = arith.addf %156, %157 : vector<1x256xf32>
    %159 = arith.divf %150, %158 : vector<1x256xf32>
    %160 = arith.cmpf ogt, %159, %107 : vector<1x256xf32>
    %161 = arith.select %160, %159, %107 : vector<1x256xi1>, vector<1x256xf32>
    %162 = vector.broadcast %120 : f32 to vector<1x256xf32>
    %163 = arith.select %160, %162, %109 : vector<1x256xi1>, vector<1x256xf32>
    %164 = vector.broadcast %125 : f32 to vector<1x256xf32>
    %165 = arith.select %160, %164, %111 : vector<1x256xi1>, vector<1x256xf32>
    %166 = vector.broadcast %130 : f32 to vector<1x256xf32>
    %167 = arith.select %160, %166, %113 : vector<1x256xi1>, vector<1x256xf32>
    %168 = vector.broadcast %135 : f32 to vector<1x256xf32>
    %169 = arith.select %160, %168, %115 : vector<1x256xi1>, vector<1x256xf32>
    %c3_i32_33 = arith.constant 3 : i32
    %c4_i32_34 = arith.constant 4 : i32
    %170 = arith.muli %c4_i32_34, %c3_i32_33 : i32
    %c0_i32_35 = arith.constant 0 : i32
    %171 = arith.addi %170, %c0_i32_35 : i32
    %172 = arith.index_cast %arg0 : i32 to index
    %173 = arith.index_cast %171 : i32 to index
    %174 = memref.load %arg3[%172, %173] : memref<2x32xf32, #tpu.memory_space<smem>>
    %c4_i32_36 = arith.constant 4 : i32
    %175 = arith.muli %c4_i32_36, %c3_i32_33 : i32
    %c1_i32_37 = arith.constant 1 : i32
    %176 = arith.addi %175, %c1_i32_37 : i32
    %177 = arith.index_cast %arg0 : i32 to index
    %178 = arith.index_cast %176 : i32 to index
    %179 = memref.load %arg3[%177, %178] : memref<2x32xf32, #tpu.memory_space<smem>>
    %c4_i32_38 = arith.constant 4 : i32
    %180 = arith.muli %c4_i32_38, %c3_i32_33 : i32
    %c2_i32_39 = arith.constant 2 : i32
    %181 = arith.addi %180, %c2_i32_39 : i32
    %182 = arith.index_cast %arg0 : i32 to index
    %183 = arith.index_cast %181 : i32 to index
    %184 = memref.load %arg3[%182, %183] : memref<2x32xf32, #tpu.memory_space<smem>>
    %c4_i32_40 = arith.constant 4 : i32
    %185 = arith.muli %c4_i32_40, %c3_i32_33 : i32
    %c3_i32_41 = arith.constant 3 : i32
    %186 = arith.addi %185, %c3_i32_41 : i32
    %187 = arith.index_cast %arg0 : i32 to index
    %188 = arith.index_cast %186 : i32 to index
    %189 = memref.load %arg3[%187, %188] : memref<2x32xf32, #tpu.memory_space<smem>>
    %190 = vector.broadcast %184 : f32 to vector<1x256xf32>
    %191 = arith.minimumf %3, %190 : vector<1x256xf32>
    %192 = vector.broadcast %174 : f32 to vector<1x256xf32>
    %193 = arith.maximumf %1, %192 : vector<1x256xf32>
    %194 = arith.subf %191, %193 : vector<1x256xf32>
    %cst_42 = arith.constant 0.000000e+00 : f32
    %195 = vector.broadcast %cst_42 : f32 to vector<1x256xf32>
    %196 = arith.maximumf %194, %195 : vector<1x256xf32>
    %197 = vector.broadcast %189 : f32 to vector<1x256xf32>
    %198 = arith.minimumf %4, %197 : vector<1x256xf32>
    %199 = vector.broadcast %179 : f32 to vector<1x256xf32>
    %200 = arith.maximumf %2, %199 : vector<1x256xf32>
    %201 = arith.subf %198, %200 : vector<1x256xf32>
    %cst_43 = arith.constant 0.000000e+00 : f32
    %202 = vector.broadcast %cst_43 : f32 to vector<1x256xf32>
    %203 = arith.maximumf %201, %202 : vector<1x256xf32>
    %204 = arith.mulf %196, %203 : vector<1x256xf32>
    %205 = arith.subf %184, %174 : f32
    %206 = arith.subf %189, %179 : f32
    %207 = arith.mulf %205, %206 : f32
    %208 = vector.broadcast %207 : f32 to vector<1x256xf32>
    %209 = arith.addf %5, %208 : vector<1x256xf32>
    %210 = arith.subf %209, %204 : vector<1x256xf32>
    %cst_44 = arith.constant 1.000000e-10 : f32
    %211 = vector.broadcast %cst_44 : f32 to vector<1x256xf32>
    %212 = arith.addf %210, %211 : vector<1x256xf32>
    %213 = arith.divf %204, %212 : vector<1x256xf32>
    %214 = arith.cmpf ogt, %213, %161 : vector<1x256xf32>
    %215 = arith.select %214, %213, %161 : vector<1x256xi1>, vector<1x256xf32>
    %216 = vector.broadcast %174 : f32 to vector<1x256xf32>
    %217 = arith.select %214, %216, %163 : vector<1x256xi1>, vector<1x256xf32>
    %218 = vector.broadcast %179 : f32 to vector<1x256xf32>
    %219 = arith.select %214, %218, %165 : vector<1x256xi1>, vector<1x256xf32>
    %220 = vector.broadcast %184 : f32 to vector<1x256xf32>
    %221 = arith.select %214, %220, %167 : vector<1x256xi1>, vector<1x256xf32>
    %222 = vector.broadcast %189 : f32 to vector<1x256xf32>
    %223 = arith.select %214, %222, %169 : vector<1x256xi1>, vector<1x256xf32>
    %c4_i32_45 = arith.constant 4 : i32
    %c4_i32_46 = arith.constant 4 : i32
    %224 = arith.muli %c4_i32_46, %c4_i32_45 : i32
    %c0_i32_47 = arith.constant 0 : i32
    %225 = arith.addi %224, %c0_i32_47 : i32
    %226 = arith.index_cast %arg0 : i32 to index
    %227 = arith.index_cast %225 : i32 to index
    %228 = memref.load %arg3[%226, %227] : memref<2x32xf32, #tpu.memory_space<smem>>
    %c4_i32_48 = arith.constant 4 : i32
    %229 = arith.muli %c4_i32_48, %c4_i32_45 : i32
    %c1_i32_49 = arith.constant 1 : i32
    %230 = arith.addi %229, %c1_i32_49 : i32
    %231 = arith.index_cast %arg0 : i32 to index
    %232 = arith.index_cast %230 : i32 to index
    %233 = memref.load %arg3[%231, %232] : memref<2x32xf32, #tpu.memory_space<smem>>
    %c4_i32_50 = arith.constant 4 : i32
    %234 = arith.muli %c4_i32_50, %c4_i32_45 : i32
    %c2_i32_51 = arith.constant 2 : i32
    %235 = arith.addi %234, %c2_i32_51 : i32
    %236 = arith.index_cast %arg0 : i32 to index
    %237 = arith.index_cast %235 : i32 to index
    %238 = memref.load %arg3[%236, %237] : memref<2x32xf32, #tpu.memory_space<smem>>
    %c4_i32_52 = arith.constant 4 : i32
    %239 = arith.muli %c4_i32_52, %c4_i32_45 : i32
    %c3_i32_53 = arith.constant 3 : i32
    %240 = arith.addi %239, %c3_i32_53 : i32
    %241 = arith.index_cast %arg0 : i32 to index
    %242 = arith.index_cast %240 : i32 to index
    %243 = memref.load %arg3[%241, %242] : memref<2x32xf32, #tpu.memory_space<smem>>
    %244 = vector.broadcast %238 : f32 to vector<1x256xf32>
    %245 = arith.minimumf %3, %244 : vector<1x256xf32>
    %246 = vector.broadcast %228 : f32 to vector<1x256xf32>
    %247 = arith.maximumf %1, %246 : vector<1x256xf32>
    %248 = arith.subf %245, %247 : vector<1x256xf32>
    %cst_54 = arith.constant 0.000000e+00 : f32
    %249 = vector.broadcast %cst_54 : f32 to vector<1x256xf32>
    %250 = arith.maximumf %248, %249 : vector<1x256xf32>
    %251 = vector.broadcast %243 : f32 to vector<1x256xf32>
    %252 = arith.minimumf %4, %251 : vector<1x256xf32>
    %253 = vector.broadcast %233 : f32 to vector<1x256xf32>
    %254 = arith.maximumf %2, %253 : vector<1x256xf32>
    %255 = arith.subf %252, %254 : vector<1x256xf32>
    %cst_55 = arith.constant 0.000000e+00 : f32
    %256 = vector.broadcast %cst_55 : f32 to vector<1x256xf32>
    %257 = arith.maximumf %255, %256 : vector<1x256xf32>
    %258 = arith.mulf %250, %257 : vector<1x256xf32>
    %259 = arith.subf %238, %228 : f32
    %260 = arith.subf %243, %233 : f32
    %261 = arith.mulf %259, %260 : f32
    %262 = vector.broadcast %261 : f32 to vector<1x256xf32>
    %263 = arith.addf %5, %262 : vector<1x256xf32>
    %264 = arith.subf %263, %258 : vector<1x256xf32>
    %cst_56 = arith.constant 1.000000e-10 : f32
    %265 = vector.broadcast %cst_56 : f32 to vector<1x256xf32>
    %266 = arith.addf %264, %265 : vector<1x256xf32>
    %267 = arith.divf %258, %266 : vector<1x256xf32>
    %268 = arith.cmpf ogt, %267, %215 : vector<1x256xf32>
    %269 = arith.select %268, %267, %215 : vector<1x256xi1>, vector<1x256xf32>
    %270 = vector.broadcast %228 : f32 to vector<1x256xf32>
    %271 = arith.select %268, %270, %217 : vector<1x256xi1>, vector<1x256xf32>
    %272 = vector.broadcast %233 : f32 to vector<1x256xf32>
    %273 = arith.select %268, %272, %219 : vector<1x256xi1>, vector<1x256xf32>
    %274 = vector.broadcast %238 : f32 to vector<1x256xf32>
    %275 = arith.select %268, %274, %221 : vector<1x256xi1>, vector<1x256xf32>
    %276 = vector.broadcast %243 : f32 to vector<1x256xf32>
    %277 = arith.select %268, %276, %223 : vector<1x256xi1>, vector<1x256xf32>
    %c5_i32 = arith.constant 5 : i32
    %c4_i32_57 = arith.constant 4 : i32
    %278 = arith.muli %c4_i32_57, %c5_i32 : i32
    %c0_i32_58 = arith.constant 0 : i32
    %279 = arith.addi %278, %c0_i32_58 : i32
    %280 = arith.index_cast %arg0 : i32 to index
    %281 = arith.index_cast %279 : i32 to index
    %282 = memref.load %arg3[%280, %281] : memref<2x32xf32, #tpu.memory_space<smem>>
    %c4_i32_59 = arith.constant 4 : i32
    %283 = arith.muli %c4_i32_59, %c5_i32 : i32
    %c1_i32_60 = arith.constant 1 : i32
    %284 = arith.addi %283, %c1_i32_60 : i32
    %285 = arith.index_cast %arg0 : i32 to index
    %286 = arith.index_cast %284 : i32 to index
    %287 = memref.load %arg3[%285, %286] : memref<2x32xf32, #tpu.memory_space<smem>>
    %c4_i32_61 = arith.constant 4 : i32
    %288 = arith.muli %c4_i32_61, %c5_i32 : i32
    %c2_i32_62 = arith.constant 2 : i32
    %289 = arith.addi %288, %c2_i32_62 : i32
    %290 = arith.index_cast %arg0 : i32 to index
    %291 = arith.index_cast %289 : i32 to index
    %292 = memref.load %arg3[%290, %291] : memref<2x32xf32, #tpu.memory_space<smem>>
    %c4_i32_63 = arith.constant 4 : i32
    %293 = arith.muli %c4_i32_63, %c5_i32 : i32
    %c3_i32_64 = arith.constant 3 : i32
    %294 = arith.addi %293, %c3_i32_64 : i32
    %295 = arith.index_cast %arg0 : i32 to index
    %296 = arith.index_cast %294 : i32 to index
    %297 = memref.load %arg3[%295, %296] : memref<2x32xf32, #tpu.memory_space<smem>>
    %298 = vector.broadcast %292 : f32 to vector<1x256xf32>
    %299 = arith.minimumf %3, %298 : vector<1x256xf32>
    %300 = vector.broadcast %282 : f32 to vector<1x256xf32>
    %301 = arith.maximumf %1, %300 : vector<1x256xf32>
    %302 = arith.subf %299, %301 : vector<1x256xf32>
    %cst_65 = arith.constant 0.000000e+00 : f32
    %303 = vector.broadcast %cst_65 : f32 to vector<1x256xf32>
    %304 = arith.maximumf %302, %303 : vector<1x256xf32>
    %305 = vector.broadcast %297 : f32 to vector<1x256xf32>
    %306 = arith.minimumf %4, %305 : vector<1x256xf32>
    %307 = vector.broadcast %287 : f32 to vector<1x256xf32>
    %308 = arith.maximumf %2, %307 : vector<1x256xf32>
    %309 = arith.subf %306, %308 : vector<1x256xf32>
    %cst_66 = arith.constant 0.000000e+00 : f32
    %310 = vector.broadcast %cst_66 : f32 to vector<1x256xf32>
    %311 = arith.maximumf %309, %310 : vector<1x256xf32>
    %312 = arith.mulf %304, %311 : vector<1x256xf32>
    %313 = arith.subf %292, %282 : f32
    %314 = arith.subf %297, %287 : f32
    %315 = arith.mulf %313, %314 : f32
    %316 = vector.broadcast %315 : f32 to vector<1x256xf32>
    %317 = arith.addf %5, %316 : vector<1x256xf32>
    %318 = arith.subf %317, %312 : vector<1x256xf32>
    %cst_67 = arith.constant 1.000000e-10 : f32
    %319 = vector.broadcast %cst_67 : f32 to vector<1x256xf32>
    %320 = arith.addf %318, %319 : vector<1x256xf32>
    %321 = arith.divf %312, %320 : vector<1x256xf32>
    %322 = arith.cmpf ogt, %321, %269 : vector<1x256xf32>
    %323 = arith.select %322, %321, %269 : vector<1x256xi1>, vector<1x256xf32>
    %324 = vector.broadcast %282 : f32 to vector<1x256xf32>
    %325 = arith.select %322, %324, %271 : vector<1x256xi1>, vector<1x256xf32>
    %326 = vector.broadcast %287 : f32 to vector<1x256xf32>
    %327 = arith.select %322, %326, %273 : vector<1x256xi1>, vector<1x256xf32>
    %328 = vector.broadcast %292 : f32 to vector<1x256xf32>
    %329 = arith.select %322, %328, %275 : vector<1x256xi1>, vector<1x256xf32>
    %330 = vector.broadcast %297 : f32 to vector<1x256xf32>
    %331 = arith.select %322, %330, %277 : vector<1x256xi1>, vector<1x256xf32>
    %c6_i32 = arith.constant 6 : i32
    %c4_i32_68 = arith.constant 4 : i32
    %332 = arith.muli %c4_i32_68, %c6_i32 : i32
    %c0_i32_69 = arith.constant 0 : i32
    %333 = arith.addi %332, %c0_i32_69 : i32
    %334 = arith.index_cast %arg0 : i32 to index
    %335 = arith.index_cast %333 : i32 to index
    %336 = memref.load %arg3[%334, %335] : memref<2x32xf32, #tpu.memory_space<smem>>
    %c4_i32_70 = arith.constant 4 : i32
    %337 = arith.muli %c4_i32_70, %c6_i32 : i32
    %c1_i32_71 = arith.constant 1 : i32
    %338 = arith.addi %337, %c1_i32_71 : i32
    %339 = arith.index_cast %arg0 : i32 to index
    %340 = arith.index_cast %338 : i32 to index
    %341 = memref.load %arg3[%339, %340] : memref<2x32xf32, #tpu.memory_space<smem>>
    %c4_i32_72 = arith.constant 4 : i32
    %342 = arith.muli %c4_i32_72, %c6_i32 : i32
    %c2_i32_73 = arith.constant 2 : i32
    %343 = arith.addi %342, %c2_i32_73 : i32
    %344 = arith.index_cast %arg0 : i32 to index
    %345 = arith.index_cast %343 : i32 to index
    %346 = memref.load %arg3[%344, %345] : memref<2x32xf32, #tpu.memory_space<smem>>
    %c4_i32_74 = arith.constant 4 : i32
    %347 = arith.muli %c4_i32_74, %c6_i32 : i32
    %c3_i32_75 = arith.constant 3 : i32
    %348 = arith.addi %347, %c3_i32_75 : i32
    %349 = arith.index_cast %arg0 : i32 to index
    %350 = arith.index_cast %348 : i32 to index
    %351 = memref.load %arg3[%349, %350] : memref<2x32xf32, #tpu.memory_space<smem>>
    %352 = vector.broadcast %346 : f32 to vector<1x256xf32>
    %353 = arith.minimumf %3, %352 : vector<1x256xf32>
    %354 = vector.broadcast %336 : f32 to vector<1x256xf32>
    %355 = arith.maximumf %1, %354 : vector<1x256xf32>
    %356 = arith.subf %353, %355 : vector<1x256xf32>
    %cst_76 = arith.constant 0.000000e+00 : f32
    %357 = vector.broadcast %cst_76 : f32 to vector<1x256xf32>
    %358 = arith.maximumf %356, %357 : vector<1x256xf32>
    %359 = vector.broadcast %351 : f32 to vector<1x256xf32>
    %360 = arith.minimumf %4, %359 : vector<1x256xf32>
    %361 = vector.broadcast %341 : f32 to vector<1x256xf32>
    %362 = arith.maximumf %2, %361 : vector<1x256xf32>
    %363 = arith.subf %360, %362 : vector<1x256xf32>
    %cst_77 = arith.constant 0.000000e+00 : f32
    %364 = vector.broadcast %cst_77 : f32 to vector<1x256xf32>
    %365 = arith.maximumf %363, %364 : vector<1x256xf32>
    %366 = arith.mulf %358, %365 : vector<1x256xf32>
    %367 = arith.subf %346, %336 : f32
    %368 = arith.subf %351, %341 : f32
    %369 = arith.mulf %367, %368 : f32
    %370 = vector.broadcast %369 : f32 to vector<1x256xf32>
    %371 = arith.addf %5, %370 : vector<1x256xf32>
    %372 = arith.subf %371, %366 : vector<1x256xf32>
    %cst_78 = arith.constant 1.000000e-10 : f32
    %373 = vector.broadcast %cst_78 : f32 to vector<1x256xf32>
    %374 = arith.addf %372, %373 : vector<1x256xf32>
    %375 = arith.divf %366, %374 : vector<1x256xf32>
    %376 = arith.cmpf ogt, %375, %323 : vector<1x256xf32>
    %377 = arith.select %376, %375, %323 : vector<1x256xi1>, vector<1x256xf32>
    %378 = vector.broadcast %336 : f32 to vector<1x256xf32>
    %379 = arith.select %376, %378, %325 : vector<1x256xi1>, vector<1x256xf32>
    %380 = vector.broadcast %341 : f32 to vector<1x256xf32>
    %381 = arith.select %376, %380, %327 : vector<1x256xi1>, vector<1x256xf32>
    %382 = vector.broadcast %346 : f32 to vector<1x256xf32>
    %383 = arith.select %376, %382, %329 : vector<1x256xi1>, vector<1x256xf32>
    %384 = vector.broadcast %351 : f32 to vector<1x256xf32>
    %385 = arith.select %376, %384, %331 : vector<1x256xi1>, vector<1x256xf32>
    %c7_i32 = arith.constant 7 : i32
    %c4_i32_79 = arith.constant 4 : i32
    %386 = arith.muli %c4_i32_79, %c7_i32 : i32
    %c0_i32_80 = arith.constant 0 : i32
    %387 = arith.addi %386, %c0_i32_80 : i32
    %388 = arith.index_cast %arg0 : i32 to index
    %389 = arith.index_cast %387 : i32 to index
    %390 = memref.load %arg3[%388, %389] : memref<2x32xf32, #tpu.memory_space<smem>>
    %c4_i32_81 = arith.constant 4 : i32
    %391 = arith.muli %c4_i32_81, %c7_i32 : i32
    %c1_i32_82 = arith.constant 1 : i32
    %392 = arith.addi %391, %c1_i32_82 : i32
    %393 = arith.index_cast %arg0 : i32 to index
    %394 = arith.index_cast %392 : i32 to index
    %395 = memref.load %arg3[%393, %394] : memref<2x32xf32, #tpu.memory_space<smem>>
    %c4_i32_83 = arith.constant 4 : i32
    %396 = arith.muli %c4_i32_83, %c7_i32 : i32
    %c2_i32_84 = arith.constant 2 : i32
    %397 = arith.addi %396, %c2_i32_84 : i32
    %398 = arith.index_cast %arg0 : i32 to index
    %399 = arith.index_cast %397 : i32 to index
    %400 = memref.load %arg3[%398, %399] : memref<2x32xf32, #tpu.memory_space<smem>>
    %c4_i32_85 = arith.constant 4 : i32
    %401 = arith.muli %c4_i32_85, %c7_i32 : i32
    %c3_i32_86 = arith.constant 3 : i32
    %402 = arith.addi %401, %c3_i32_86 : i32
    %403 = arith.index_cast %arg0 : i32 to index
    %404 = arith.index_cast %402 : i32 to index
    %405 = memref.load %arg3[%403, %404] : memref<2x32xf32, #tpu.memory_space<smem>>
    %406 = vector.broadcast %400 : f32 to vector<1x256xf32>
    %407 = arith.minimumf %3, %406 : vector<1x256xf32>
    %408 = vector.broadcast %390 : f32 to vector<1x256xf32>
    %409 = arith.maximumf %1, %408 : vector<1x256xf32>
    %410 = arith.subf %407, %409 : vector<1x256xf32>
    %cst_87 = arith.constant 0.000000e+00 : f32
    %411 = vector.broadcast %cst_87 : f32 to vector<1x256xf32>
    %412 = arith.maximumf %410, %411 : vector<1x256xf32>
    %413 = vector.broadcast %405 : f32 to vector<1x256xf32>
    %414 = arith.minimumf %4, %413 : vector<1x256xf32>
    %415 = vector.broadcast %395 : f32 to vector<1x256xf32>
    %416 = arith.maximumf %2, %415 : vector<1x256xf32>
    %417 = arith.subf %414, %416 : vector<1x256xf32>
    %cst_88 = arith.constant 0.000000e+00 : f32
    %418 = vector.broadcast %cst_88 : f32 to vector<1x256xf32>
    %419 = arith.maximumf %417, %418 : vector<1x256xf32>
    %420 = arith.mulf %412, %419 : vector<1x256xf32>
    %421 = arith.subf %400, %390 : f32
    %422 = arith.subf %405, %395 : f32
    %423 = arith.mulf %421, %422 : f32
    %424 = vector.broadcast %423 : f32 to vector<1x256xf32>
    %425 = arith.addf %5, %424 : vector<1x256xf32>
    %426 = arith.subf %425, %420 : vector<1x256xf32>
    %cst_89 = arith.constant 1.000000e-10 : f32
    %427 = vector.broadcast %cst_89 : f32 to vector<1x256xf32>
    %428 = arith.addf %426, %427 : vector<1x256xf32>
    %429 = arith.divf %420, %428 : vector<1x256xf32>
    %430 = arith.cmpf ogt, %429, %377 : vector<1x256xf32>
    %431 = arith.select %430, %429, %377 : vector<1x256xi1>, vector<1x256xf32>
    %432 = vector.broadcast %390 : f32 to vector<1x256xf32>
    %433 = arith.select %430, %432, %379 : vector<1x256xi1>, vector<1x256xf32>
    %434 = vector.broadcast %395 : f32 to vector<1x256xf32>
    %435 = arith.select %430, %434, %381 : vector<1x256xi1>, vector<1x256xf32>
    %436 = vector.broadcast %400 : f32 to vector<1x256xf32>
    %437 = arith.select %430, %436, %383 : vector<1x256xi1>, vector<1x256xf32>
    %438 = vector.broadcast %405 : f32 to vector<1x256xf32>
    %439 = arith.select %430, %438, %385 : vector<1x256xi1>, vector<1x256xf32>
    %c8_i32 = arith.constant 8 : i32
    %cst_90 = arith.constant 3.500000e-01 : f32
    %440 = vector.broadcast %cst_90 : f32 to vector<1x256xf32>
    %441 = arith.cmpf oge, %431, %440 : vector<1x256xf32>
    %442 = arith.extui %441 : vector<1x256xi1> to vector<1x256xi32>
    %443 = arith.sitofp %442 : vector<1x256xi32> to vector<1x256xf32>
    %cst_91 = arith.constant 1.000000e-01 : f32
    %444 = vector.broadcast %cst_91 : f32 to vector<1x256xf32>
    %445 = arith.cmpf olt, %431, %444 : vector<1x256xf32>
    %446 = arith.extui %445 : vector<1x256xi1> to vector<1x256xi32>
    %447 = arith.sitofp %446 : vector<1x256xi32> to vector<1x256xf32>
    %448 = tpu.concatenate %433, %435, %437, %439, %431, %443, %447, %6 in 0 : vector<1x256xf32>, vector<1x256xf32>, vector<1x256xf32>, vector<1x256xf32>, vector<1x256xf32>, vector<1x256xf32>, vector<1x256xf32>, vector<1x256xf32> -> vector<8x256xf32>
    %449 = vector.shape_cast %448 : vector<8x256xf32> to vector<1x8x256xf32>
    %c0_92 = arith.constant 0 : index
    %c0_93 = arith.constant 0 : index
    %c0_94 = arith.constant 0 : index
    %450 = vector.load %arg4[%c0_92, %c0_93, %c0_94] : memref<1x8x256xf32, #tpu.memory_space<vmem>>, vector<1x8x256xf32>
    tpu.vector_store %arg4[%c0_92, %c0_93, %c0_94], %449 {strides = array<i32>} : memref<1x8x256xf32, #tpu.memory_space<vmem>>, vector<1x8x256xf32>,
    return
  }
  func.func @transform_0(%arg0: i32, %arg1: i32) -> (i32, i32) {
    %c0_i32 = arith.constant 0 : i32
    %c0_i32_0 = arith.constant 0 : i32
    return %c0_i32, %arg1 : i32, i32
  }
  func.func @transform_1(%arg0: i32, %arg1: i32) -> (i32, i32) {
    %c0_i32 = arith.constant 0 : i32
    %c0_i32_0 = arith.constant 0 : i32
    %c0_i32_1 = arith.constant 0 : i32
    return %c0_i32, %c0_i32_0 : i32, i32
  }
  func.func @transform_2(%arg0: i32, %arg1: i32) -> (i32, i32, i32) {
    %c0_i32 = arith.constant 0 : i32
    %c0_i32_0 = arith.constant 0 : i32
    return %arg0, %c0_i32, %arg1 : i32, i32, i32
  }
}

</mosaic_0001>

<llo_original>
// kernel: tpu_custom_call.1
$region0: #{tpu_custom_call.1}
  #allocation0 [shape = 'u32[]', space=smem, size = 0x4, offset = 0x4, fixed_abs, tag = 'smem constant byte address 0x4 - core index']
  #allocation1 [shape = 'u32[144,128]{1,0:T(1,128)}', space=vmem, size = 0x12000, scoped, tag = 'internal scratch']
  %s0 = inlined_call_operand.hbm [shape: f32[8,256], index: 0, kind: input, shape index: {}]
  %s1 = inlined_call_operand.hbm [shape: f32[2,32], index: 1, kind: input, shape index: {}]
  %s2 = inlined_call_operand.hbm [shape: f32[2,8,256], index: 2, kind: output, shape index: {}]
  %s3 = sld [smem:[#allocation0]]
  $region49: #{tpu_custom_call.1} parent=0
    _
  %s5 = ssub.s32 1, %s3
  %s6 = scalar_select 0, %s5, %s3
  $region1: #{tpu_custom_call.1} parent=0
    #allocation2 [shape = 'u8[8192]{0}', space=vmem, size = 0x2000, scoped, tag = 'input window, operand 0, single buffered']
    #allocation3 [shape = 's32[2]{0}', space=sflag, size = 0x8, scoped, tag = 'scoped memory for tpu_custom_call.1']
    #allocation4 [shape = 's32[2]{0}', space=sflag, size = 0x8, scoped, tag = 'scoped memory for tpu_custom_call.1']
    #allocation5 [shape = 's32[2]{0}', space=sflag, size = 0x8, scoped, tag = 'scoped memory for tpu_custom_call.1']
    #allocation6 [shape = 'u8[1024]{0}', space=smem, size = 0x400, scoped, tag = 'input window, operand 1, single buffered']
    #allocation7 [shape = 'u8[16384]{0}', space=vmem, size = 0x4000, scoped, tag = 'output window, operand 0']
    %7 = vsyncpa [#allocation3], 0
    %8 = vsyncpa [#allocation5], 0
    %9 = vsyncpa [#allocation4], 0
    %s10 = scalar_lea.sflag [#allocation4], 1
    %11 = vsyncpa %s10, 0
    loop: start=0, step=1, limit=4
    $region2: #{tpu_custom_call.1} parent=1 // loop_pre_header
      _
    $region3: #{tpu_custom_call.1} parent=1 // loop_header
      %s13 = sphi 0, %s17
      %p14 = scmp.ge.s32.totalorder %s13, 4
      %s20 = sphi 0, %s32
      %s21 = sphi 0, %s28
      %s22 = sphi 0, %s20
      %s23 = sphi 0, %s21
      %s24 = sphi 0, %s22
      %s25 = sphi 0, %s23
      %s35 = sphi 0, %s37
      %s38 = sphi 0, %s35
      %s39 = sphi 0, %s38
      %s55 = sphi 0, %s39
      %s59 = sphi 0, %s59
      %s61 = sphi 0, %s59
      %s62 = sphi 0, %s61
      %s76 = sphi 0, %s62
      %s84 = sphi 0, %s86
      %s87 = sphi 0, %s84
      %s88 = sphi 0, %s87
      %s104 = sphi 0, %s88
    $region4: #{tpu_custom_call.1} parent=1 // loop_header_branch
      %16 = sbr.rel (%p14) target = $region8
    $region5: #{tpu_custom_call.1} parent=1 // loop_body
      %s18 = ssub.s32 %s13, 1
      %s19 = ssub.s32 %s13, 2
      %s26 = sadd.s32 1, %s21
      %p27 = scmp.ge.s32.totalorder %s26, 1
      %s28 = scalar_select %p27, 0, %s26
      %s29 = sadd.s32 1, %s20
      %s30 = scalar_select %p27, %s29, %s20
      %p31 = scmp.ge.s32.totalorder %s30, 2
      %s32 = scalar_select %p31, 0, %s30
      %s33 = ssub.s32 %s21, %s28
      %p34 = scmp.eq.s32.totalorder %s33, 0
      %s36 = sadd.s32 %s35, 1
      %s37 = scalar_select %p34, %s35, %s36
      %p40 = pneg %p34
      %p41 = scmp.eq.s32.totalorder %s13, 1
      %p42 = por %p40, %p41
      %p43 = scmp.ne.s32.totalorder %s35, %s38
      %p44 = scmp.eq.s32.totalorder %s13, 0
      %p45 = por %p43, %p44
      %p46 = scmp.ne.s32.totalorder %s35, %s38
      %p47 = scmp.eq.s32.totalorder %s18, 1
      %p48 = por %p46, %p47
      %p49 = scmp.ne.s32.totalorder %s38, %s39
      %p50 = scmp.eq.s32.totalorder %s18, 0
      %p51 = por %p49, %p50
      %p52 = scmp.ne.s32.totalorder %s38, %s39
      %p53 = scmp.eq.s32.totalorder %s19, 1
      %p54 = por %p52, %p53
      %p56 = scmp.ne.s32.totalorder %s39, %s55
      %p57 = scmp.eq.s32.totalorder %s19, 0
      %p58 = por %p56, %p57
      %s60 = sadd.s32 %s59, 1
      %p63 = scmp.eq.s32.totalorder %s13, 1
      %p64 = scmp.ne.s32.totalorder %s59, %s61
      %p65 = scmp.eq.s32.totalorder %s13, 0
      %p66 = por %p64, %p65
      %p67 = scmp.ne.s32.totalorder %s59, %s61
      %p68 = scmp.eq.s32.totalorder %s18, 1
      %p69 = por %p67, %p68
      %p70 = scmp.ne.s32.totalorder %s61, %s62
      %p71 = scmp.eq.s32.totalorder %s18, 0
      %p72 = por %p70, %p71
      %p73 = scmp.ne.s32.totalorder %s61, %s62
      %p74 = scmp.eq.s32.totalorder %s19, 1
      %p75 = por %p73, %p74
      %p77 = scmp.ne.s32.totalorder %s62, %s76
      %p78 = scmp.eq.s32.totalorder %s19, 0
      %p79 = por %p77, %p78
      %s80 = ssub.s32 %s20, %s32
      %s81 = ssub.s32 %s21, %s28
      %s82 = sor.u32 %s80, %s81
      %p83 = scmp.eq.s32.totalorder %s82, 0
      %s85 = sadd.s32 %s84, 1
      %s86 = scalar_select %p83, %s84, %s85
      %p89 = pneg %p83
      %p90 = scmp.eq.s32.totalorder %s13, 1
      %p91 = por %p89, %p90
      %p92 = scmp.ne.s32.totalorder %s84, %s87
      %p93 = scmp.eq.s32.totalorder %s13, 0
      %p94 = por %p92, %p93
      %p95 = scmp.ne.s32.totalorder %s84, %s87
      %p96 = scmp.eq.s32.totalorder %s18, 1
      %p97 = por %p95, %p96
      %p98 = scmp.ne.s32.totalorder %s87, %s88
      %p99 = scmp.eq.s32.totalorder %s18, 0
      %p100 = por %p98, %p99
      %p101 = scmp.ne.s32.totalorder %s87, %s88
      %p102 = scmp.eq.s32.totalorder %s19, 1
      %p103 = por %p101, %p102
      %p105 = scmp.ne.s32.totalorder %s88, %s104
      %p106 = scmp.eq.s32.totalorder %s19, 0
      %p107 = por %p105, %p106
      %p108 = scmp.le.s32.totalorder 1, %s13
      %p109 = scmp.lt.s32.totalorder %s13, 3
      %p110 = pnand %p108, %p109
      %p111 = pneg %p110
      // Predicated region
      $region9: #{tpu_custom_call.1} parent=5 // pred_check
        _
      $region10: #{tpu_custom_call.1} parent=5 // pred_check_branch
        %113 = sbr.rel (%p110) target = $region12
      $region11: #{tpu_custom_call.1} parent=5 // pred_region
        %s114 = ssub.s32 %s13, 1
        // Predicated region
        $region13: #{tpu_custom_call.1} parent=11 // pred_check
          %p115 = pneg %p51
        $region14: #{tpu_custom_call.1} parent=11 // pred_check_branch
          %117 = sbr.rel (%p115) target = $region16
        $region15: #{tpu_custom_call.1} parent=11 // pred_region
          %s118 = smul.u32 2, %s23
          %s120 = ssub.s32 256, 256
          %121 = vsyncadd [#allocation3], %s120
          %s122 = smul.addr %s118, 128
          %s123 = scalar_lea.hbm %s0, %s122
          %s125 = sshll.u32 [#allocation2], 4
          %s126 = int_to_ptr.vmem [resolvable:$true] %s125
          %128 = dma.hbm_to_vmem [thread:$0]  %s123, 256, %s126, [#allocation3]
        $region16: #{tpu_custom_call.1} parent=11 // pred_fallthru
          _
        // Predicated region
        $region17: #{tpu_custom_call.1} parent=11 // pred_check
          %p129 = pneg %p72
        $region18: #{tpu_custom_call.1} parent=11 // pred_check_branch
          %131 = sbr.rel (%p129) target = $region20
        $region19: #{tpu_custom_call.1} parent=11 // pred_region
          %s133 = ssub.s32 32, 32
          %134 = vsyncadd [#allocation5], %s133
          %137 = dma.hbm_to_smem %s1, 32, [#allocation6], [#allocation5]
        $region20: #{tpu_custom_call.1} parent=11 // pred_fallthru
          _
      $region12: #{tpu_custom_call.1} parent=5 // pred_fallthru
        _
      %p138 = scmp.lt.s32.totalorder %s13, 2
      // Predicated region
      $region21: #{tpu_custom_call.1} parent=5 // pred_check
        %p139 = pneg %p138
      $region22: #{tpu_custom_call.1} parent=5 // pred_check_branch
        %141 = sbr.rel (%p139) target = $region24
      $region23: #{tpu_custom_call.1} parent=5 // pred_region
        _
      $region24: #{tpu_custom_call.1} parent=5 // pred_fallthru
        _
      %p142 = scmp.le.s32.totalorder 1, %s13
      %p143 = scmp.lt.s32.totalorder %s13, 3
      %p144 = pnand %p142, %p143
      %p145 = pneg %p144
      // Predicated region
      $region25: #{tpu_custom_call.1} parent=5 // pred_check
        _
      $region26: #{tpu_custom_call.1} parent=5 // pred_check_branch
        %147 = sbr.rel (%p144) target = $region28
      $region27: #{tpu_custom_call.1} parent=5 // pred_region
        %s148 = ssub.s32 %s13, 1
        // Predicated region
        $region29: #{tpu_custom_call.1} parent=27 // pred_check
          %p149 = pneg %p51
        $region30: #{tpu_custom_call.1} parent=27 // pred_check_branch
          %151 = sbr.rel (%p149) target = $region32
        $region31: #{tpu_custom_call.1} parent=27 // pred_region
          %152 = dma.done [#allocation3], 256
        $region32: #{tpu_custom_call.1} parent=27 // pred_fallthru
          _
        // Predicated region
        $region33: #{tpu_custom_call.1} parent=27 // pred_check
          %p153 = pneg %p72
        $region34: #{tpu_custom_call.1} parent=27 // pred_check_branch
          %155 = sbr.rel (%p153) target = $region36
        $region35: #{tpu_custom_call.1} parent=27 // pred_region
          %156 = dma.done [#allocation5], 32
        $region36: #{tpu_custom_call.1} parent=27 // pred_fallthru
          _
        %157 = sfence
        %p158 = pneg %p51
        %p159 = pneg %p48
        %p160 = pneg %p72
        %p161 = pneg %p69
        %p162 = pneg %p100
        %p163 = pneg %p97
        %s164 = sand.u32 %s87, 1
        %s165 = scalar_lea.sflag [#allocation4], %s164
        %s166 = sand.u32 %s87, 1
        %s167 = smul.addr %s166, 16
        %s168 = scalar_lea.vmem [#allocation7], %s167
        %s169 = smul.u32 2, %s23
        %s170 = smul.u32 2, %s23
        %v171 = vld [vmem:[#allocation2] sm:$0xff]
        %v172 = vld [vmem:[#allocation2 + $0x8] sm:$0xff]
        %s173 = smul.u32 %s22, 128
        %s174 = sld [smem:[#allocation6 + %s173]]
        %s175 = sadd.s32 %s173, 1
        %s176 = sld [smem:[#allocation6 + %s175]]
        %s177 = sadd.s32 %s173, 2
        %s178 = sld [smem:[#allocation6 + %s177]]
        %s179 = sadd.s32 %s173, 3
        %s180 = sld [smem:[#allocation6 + %s179]]
        %v181 = vstv %s178
        %v182 = vmin.f32 %v171, %v181
        %v183 = vmin.f32 %v172, %v181
        %v184 = vstv %s174
        %v185 = vmax.f32 %v171, %v184
        %v186 = vmax.f32 %v172, %v184
        %v189 = vrot.slane %v185, 6
        %v190 = vrot.slane %v186, 6
        %v193 = vsub.f32 %v182, %v189
        %v194 = vsub.f32 %v183, %v190
        %v195 = vmax.f32 %v193, 0.0
        %v196 = vmax.f32 %v194, 0.0
        %v197 = vstv %s180
        %v198 = vmin.f32 %v171, %v197
        %v199 = vmin.f32 %v172, %v197
        %v200 = vstv %s176
        %v201 = vmax.f32 %v171, %v200
        %v202 = vmax.f32 %v172, %v200
        %v205 = vrot.slane %v201, 6
        %v206 = vrot.slane %v202, 6
        %v209 = vsub.f32 %v198, %v205
        %v210 = vsub.f32 %v199, %v206
        %v211 = vmax.f32 %v209, 0.0
        %v212 = vmax.f32 %v210, 0.0
        %v215 = vrot.slane %v211, 1
        %v216 = vrot.slane %v212, 1
        %v219 = vmul.f32 %v195, %v215
        %v220 = vmul.f32 %v196, %v216
        %s221 = ssub.f32 %s178, %s174
        %s222 = ssub.f32 %s180, %s176
        %s223 = smul.f32 %s221, %s222
        %v224 = vstv %s223
        %v225 = vadd.f32 %v171, %v224
        %v226 = vadd.f32 %v172, %v224
        %v229 = vrot.slane %v219, 6
        %v230 = vrot.slane %v220, 6
        %v233 = vsub.f32 %v225, %v229
        %v234 = vsub.f32 %v226, %v230
        %v235 = vadd.f32 %v233, 1e-10
        %v236 = vadd.f32 %v234, 1e-10
        %v239 = vrot.slane %v235, 2
        %v240 = vrot.slane %v236, 2
        %v243 = vrcp.pop %v239
        %v244 = vmul.f32 %v219, %v243
        %v245 = vrcp.pop %v240
        %v246 = vmul.f32 %v220, %v245
        %vm247 = vcmp.gt.f32.partialorder %v244, -1.0
        %vm248 = vcmp.gt.f32.partialorder %v246, -1.0
        %v249 = vsel %vm247, %v244, -1.0
        %v250 = vsel %vm248, %v246, -1.0
        %v251 = vsel %vm247, %v184, 0.0
        %v252 = vsel %vm248, %v184, 0.0
        %v253 = vsel %vm247, %v200, 0.0
        %v254 = vsel %vm248, %v200, 0.0
        %v255 = vsel %vm247, %v181, 0.0
        %v256 = vsel %vm248, %v181, 0.0
        %v257 = vsel %vm247, %v197, 0.0
        %v258 = vsel %vm248, %v197, 0.0
        %s259 = sadd.s32 %s173, 4
        %s260 = sld [smem:[#allocation6 + %s259]]
        %s261 = sadd.s32 %s173, 5
        %s262 = sld [smem:[#allocation6 + %s261]]
        %s263 = sadd.s32 %s173, 6
        %s264 = sld [smem:[#allocation6 + %s263]]
        %s265 = sadd.s32 %s173, 7
        %s266 = sld [smem:[#allocation6 + %s265]]
        %v267 = vstv %s264
        %v268 = vmin.f32 %v171, %v267
        %v269 = vmin.f32 %v172, %v267
        %v270 = vstv %s260
        %v271 = vmax.f32 %v171, %v270
        %v272 = vmax.f32 %v172, %v270
        %v275 = vrot.slane %v271, 6
        %v276 = vrot.slane %v272, 6
        %v279 = vsub.f32 %v268, %v275
        %v280 = vsub.f32 %v269, %v276
        %v281 = vmax.f32 %v279, 0.0
        %v282 = vmax.f32 %v280, 0.0
        %v283 = vstv %s266
        %v284 = vmin.f32 %v171, %v283
        %v285 = vmin.f32 %v172, %v283
        %v286 = vstv %s262
        %v287 = vmax.f32 %v171, %v286
        %v288 = vmax.f32 %v172, %v286
        %v291 = vrot.slane %v287, 6
        %v292 = vrot.slane %v288, 6
        %v295 = vsub.f32 %v284, %v291
        %v296 = vsub.f32 %v285, %v292
        %v297 = vmax.f32 %v295, 0.0
        %v298 = vmax.f32 %v296, 0.0
        %v301 = vrot.slane %v297, 1
        %v302 = vrot.slane %v298, 1
        %v305 = vmul.f32 %v281, %v301
        %v306 = vmul.f32 %v282, %v302
        %s307 = ssub.f32 %s264, %s260
        %s308 = ssub.f32 %s266, %s262
        %s309 = smul.f32 %s307, %s308
        %v310 = vstv %s309
        %v311 = vadd.f32 %v171, %v310
        %v312 = vadd.f32 %v172, %v310
        %v315 = vrot.slane %v305, 6
        %v316 = vrot.slane %v306, 6
        %v319 = vsub.f32 %v311, %v315
        %v320 = vsub.f32 %v312, %v316
        %v321 = vadd.f32 %v319, 1e-10
        %v322 = vadd.f32 %v320, 1e-10
        %v325 = vrot.slane %v321, 2
        %v326 = vrot.slane %v322, 2
        %v329 = vrcp.pop %v325
        %v330 = vmul.f32 %v305, %v329
        %v331 = vrcp.pop %v326
        %v332 = vmul.f32 %v306, %v331
        %vm333 = vcmp.gt.f32.partialorder %v330, %v249
        %vm334 = vcmp.gt.f32.partialorder %v332, %v250
        %v335 = vsel %vm333, %v330, %v249
        %v336 = vsel %vm334, %v332, %v250
        %v337 = vsel %vm333, %v270, %v251
        %v338 = vsel %vm334, %v270, %v252
        %v339 = vsel %vm333, %v286, %v253
        %v340 = vsel %vm334, %v286, %v254
        %v341 = vsel %vm333, %v267, %v255
        %v342 = vsel %vm334, %v267, %v256
        %v343 = vsel %vm333, %v283, %v257
        %v344 = vsel %vm334, %v283, %v258
        %s345 = sadd.s32 %s173, 8
        %s346 = sld [smem:[#allocation6 + %s345]]
        %s347 = sadd.s32 %s173, 9
        %s348 = sld [smem:[#allocation6 + %s347]]
        %s349 = sadd.s32 %s173, 10
        %s350 = sld [smem:[#allocation6 + %s349]]
        %s351 = sadd.s32 %s173, 11
        %s352 = sld [smem:[#allocation6 + %s351]]
        %v353 = vstv %s350
        %v354 = vmin.f32 %v171, %v353
        %v355 = vmin.f32 %v172, %v353
        %v356 = vstv %s346
        %v357 = vmax.f32 %v171, %v356
        %v358 = vmax.f32 %v172, %v356
        %v361 = vrot.slane %v357, 6
        %v362 = vrot.slane %v358, 6
        %v365 = vsub.f32 %v354, %v361
        %v366 = vsub.f32 %v355, %v362
        %v367 = vmax.f32 %v365, 0.0
        %v368 = vmax.f32 %v366, 0.0
        %v369 = vstv %s352
        %v370 = vmin.f32 %v171, %v369
        %v371 = vmin.f32 %v172, %v369
        %v372 = vstv %s348
        %v373 = vmax.f32 %v171, %v372
        %v374 = vmax.f32 %v172, %v372
        %v377 = vrot.slane %v373, 6
        %v378 = vrot.slane %v374, 6
        %v381 = vsub.f32 %v370, %v377
        %v382 = vsub.f32 %v371, %v378
        %v383 = vmax.f32 %v381, 0.0
        %v384 = vmax.f32 %v382, 0.0
        %v387 = vrot.slane %v383, 1
        %v388 = vrot.slane %v384, 1
        %v391 = vmul.f32 %v367, %v387
        %v392 = vmul.f32 %v368, %v388
        %s393 = ssub.f32 %s350, %s346
        %s394 = ssub.f32 %s352, %s348
        %s395 = smul.f32 %s393, %s394
        %v396 = vstv %s395
        %v397 = vadd.f32 %v171, %v396
        %v398 = vadd.f32 %v172, %v396
        %v401 = vrot.slane %v391, 6
        %v402 = vrot.slane %v392, 6
        %v405 = vsub.f32 %v397, %v401
        %v406 = vsub.f32 %v398, %v402
        %v407 = vadd.f32 %v405, 1e-10
        %v408 = vadd.f32 %v406, 1e-10
        %v411 = vrot.slane %v407, 2
        %v412 = vrot.slane %v408, 2
        %v415 = vrcp.pop %v411
        %v416 = vmul.f32 %v391, %v415
        %v417 = vrcp.pop %v412
        %v418 = vmul.f32 %v392, %v417
        %vm419 = vcmp.gt.f32.partialorder %v416, %v335
        %vm420 = vcmp.gt.f32.partialorder %v418, %v336
        %v421 = vsel %vm419, %v416, %v335
        %v422 = vsel %vm420, %v418, %v336
        %v423 = vsel %vm419, %v356, %v337
        %v424 = vsel %vm420, %v356, %v338
        %v425 = vsel %vm419, %v372, %v339
        %v426 = vsel %vm420, %v372, %v340
        %v427 = vsel %vm419, %v353, %v341
        %v428 = vsel %vm420, %v353, %v342
        %v429 = vsel %vm419, %v369, %v343
        %v430 = vsel %vm420, %v369, %v344
        %s431 = sadd.s32 %s173, 12
        %s432 = sld [smem:[#allocation6 + %s431]]
        %s433 = sadd.s32 %s173, 13
        %s434 = sld [smem:[#allocation6 + %s433]]
        %s435 = sadd.s32 %s173, 14
        %s436 = sld [smem:[#allocation6 + %s435]]
        %s437 = sadd.s32 %s173, 15
        %s438 = sld [smem:[#allocation6 + %s437]]
        %v439 = vstv %s436
        %v440 = vmin.f32 %v171, %v439
        %v441 = vmin.f32 %v172, %v439
        %v442 = vstv %s432
        %v443 = vmax.f32 %v171, %v442
        %v444 = vmax.f32 %v172, %v442
        %v447 = vrot.slane %v443, 6
        %v448 = vrot.slane %v444, 6
        %v451 = vsub.f32 %v440, %v447
        %v452 = vsub.f32 %v441, %v448
        %v453 = vmax.f32 %v451, 0.0
        %v454 = vmax.f32 %v452, 0.0
        %v455 = vstv %s438
        %v456 = vmin.f32 %v171, %v455
        %v457 = vmin.f32 %v172, %v455
        %v458 = vstv %s434
        %v459 = vmax.f32 %v171, %v458
        %v460 = vmax.f32 %v172, %v458
        %v463 = vrot.slane %v459, 6
        %v464 = vrot.slane %v460, 6
        %v467 = vsub.f32 %v456, %v463
        %v468 = vsub.f32 %v457, %v464
        %v469 = vmax.f32 %v467, 0.0
        %v470 = vmax.f32 %v468, 0.0
        %v473 = vrot.slane %v469, 1
        %v474 = vrot.slane %v470, 1
        %v477 = vmul.f32 %v453, %v473
        %v478 = vmul.f32 %v454, %v474
        %s479 = ssub.f32 %s436, %s432
        %s480 = ssub.f32 %s438, %s434
        %s481 = smul.f32 %s479, %s480
        %v482 = vstv %s481
        %v483 = vadd.f32 %v171, %v482
        %v484 = vadd.f32 %v172, %v482
        %v487 = vrot.slane %v477, 6
        %v488 = vrot.slane %v478, 6
        %v491 = vsub.f32 %v483, %v487
        %v492 = vsub.f32 %v484, %v488
        %v493 = vadd.f32 %v491, 1e-10
        %v494 = vadd.f32 %v492, 1e-10
        %v497 = vrot.slane %v493, 2
        %v498 = vrot.slane %v494, 2
        %v501 = vrcp.pop %v497
        %v502 = vmul.f32 %v477, %v501
        %v503 = vrcp.pop %v498
        %v504 = vmul.f32 %v478, %v503
        %vm505 = vcmp.gt.f32.partialorder %v502, %v421
        %vm506 = vcmp.gt.f32.partialorder %v504, %v422
        %v507 = vsel %vm505, %v502, %v421
        %v508 = vsel %vm506, %v504, %v422
        %v509 = vsel %vm505, %v442, %v423
        %v510 = vsel %vm506, %v442, %v424
        %v511 = vsel %vm505, %v458, %v425
        %v512 = vsel %vm506, %v458, %v426
        %v513 = vsel %vm505, %v439, %v427
        %v514 = vsel %vm506, %v439, %v428
        %v515 = vsel %vm505, %v455, %v429
        %v516 = vsel %vm506, %v455, %v430
        %s517 = sadd.s32 %s173, 16
        %s518 = sld [smem:[#allocation6 + %s517]]
        %s519 = sadd.s32 %s173, 17
        %s520 = sld [smem:[#allocation6 + %s519]]
        %s521 = sadd.s32 %s173, 18
        %s522 = sld [smem:[#allocation6 + %s521]]
        %s523 = sadd.s32 %s173, 19
        %s524 = sld [smem:[#allocation6 + %s523]]
        %v525 = vstv %s522
        %v526 = vmin.f32 %v171, %v525
        %v527 = vmin.f32 %v172, %v525
        %v528 = vstv %s518
        %v529 = vmax.f32 %v171, %v528
        %v530 = vmax.f32 %v172, %v528
        %v533 = vrot.slane %v529, 6
        %v534 = vrot.slane %v530, 6
        %v537 = vsub.f32 %v526, %v533
        %v538 = vsub.f32 %v527, %v534
        %v539 = vmax.f32 %v537, 0.0
        %v540 = vmax.f32 %v538, 0.0
        %v541 = vstv %s524
        %v542 = vmin.f32 %v171, %v541
        %v543 = vmin.f32 %v172, %v541
        %v544 = vstv %s520
        %v545 = vmax.f32 %v171, %v544
        %v546 = vmax.f32 %v172, %v544
        %v549 = vrot.slane %v545, 6
        %v550 = vrot.slane %v546, 6
        %v553 = vsub.f32 %v542, %v549
        %v554 = vsub.f32 %v543, %v550
        %v555 = vmax.f32 %v553, 0.0
        %v556 = vmax.f32 %v554, 0.0
        %v559 = vrot.slane %v555, 1
        %v560 = vrot.slane %v556, 1
        %v563 = vmul.f32 %v539, %v559
        %v564 = vmul.f32 %v540, %v560
        %s565 = ssub.f32 %s522, %s518
        %s566 = ssub.f32 %s524, %s520
        %s567 = smul.f32 %s565, %s566
        %v568 = vstv %s567
        %v569 = vadd.f32 %v171, %v568
        %v570 = vadd.f32 %v172, %v568
        %v573 = vrot.slane %v563, 6
        %v574 = vrot.slane %v564, 6
        %v577 = vsub.f32 %v569, %v573
        %v578 = vsub.f32 %v570, %v574
        %v579 = vadd.f32 %v577, 1e-10
        %v580 = vadd.f32 %v578, 1e-10
        %v583 = vrot.slane %v579, 2
        %v584 = vrot.slane %v580, 2
        %v587 = vrcp.pop %v583
        %v588 = vmul.f32 %v563, %v587
        %v589 = vrcp.pop %v584
        %v590 = vmul.f32 %v564, %v589
        %vm591 = vcmp.gt.f32.partialorder %v588, %v507
        %vm592 = vcmp.gt.f32.partialorder %v590, %v508
        %v593 = vsel %vm591, %v588, %v507
        %v594 = vsel %vm592, %v590, %v508
        %v595 = vsel %vm591, %v528, %v509
        %v596 = vsel %vm592, %v528, %v510
        %v597 = vsel %vm591, %v544, %v511
        %v598 = vsel %vm592, %v544, %v512
        %v599 = vsel %vm591, %v525, %v513
        %v600 = vsel %vm592, %v525, %v514
        %v601 = vsel %vm591, %v541, %v515
        %v602 = vsel %vm592, %v541, %v516
        %s603 = sadd.s32 %s173, 20
        %s604 = sld [smem:[#allocation6 + %s603]]
        %s605 = sadd.s32 %s173, 21
        %s606 = sld [smem:[#allocation6 + %s605]]
        %s607 = sadd.s32 %s173, 22
        %s608 = sld [smem:[#allocation6 + %s607]]
        %s609 = sadd.s32 %s173, 23
        %s610 = sld [smem:[#allocation6 + %s609]]
        %v611 = vstv %s608
        %v612 = vmin.f32 %v171, %v611
        %v613 = vmin.f32 %v172, %v611
        %v614 = vstv %s604
        %v615 = vmax.f32 %v171, %v614
        %v616 = vmax.f32 %v172, %v614
        %v619 = vrot.slane %v615, 6
        %v620 = vrot.slane %v616, 6
        %v623 = vsub.f32 %v612, %v619
        %v624 = vsub.f32 %v613, %v620
        %v625 = vmax.f32 %v623, 0.0
        %v626 = vmax.f32 %v624, 0.0
        %v627 = vstv %s610
        %v628 = vmin.f32 %v171, %v627
        %v629 = vmin.f32 %v172, %v627
        %v630 = vstv %s606
        %v631 = vmax.f32 %v171, %v630
        %v632 = vmax.f32 %v172, %v630
        %v635 = vrot.slane %v631, 6
        %v636 = vrot.slane %v632, 6
        %v639 = vsub.f32 %v628, %v635
        %v640 = vsub.f32 %v629, %v636
        %v641 = vmax.f32 %v639, 0.0
        %v642 = vmax.f32 %v640, 0.0
        %v645 = vrot.slane %v641, 1
        %v646 = vrot.slane %v642, 1
        %v649 = vmul.f32 %v625, %v645
        %v650 = vmul.f32 %v626, %v646
        %s651 = ssub.f32 %s608, %s604
        %s652 = ssub.f32 %s610, %s606
        %s653 = smul.f32 %s651, %s652
        %v654 = vstv %s653
        %v655 = vadd.f32 %v171, %v654
        %v656 = vadd.f32 %v172, %v654
        %v659 = vrot.slane %v649, 6
        %v660 = vrot.slane %v650, 6
        %v663 = vsub.f32 %v655, %v659
        %v664 = vsub.f32 %v656, %v660
        %v665 = vadd.f32 %v663, 1e-10
        %v666 = vadd.f32 %v664, 1e-10
        %v669 = vrot.slane %v665, 2
        %v670 = vrot.slane %v666, 2
        %v673 = vrcp.pop %v669
        %v674 = vmul.f32 %v649, %v673
        %v675 = vrcp.pop %v670
        %v676 = vmul.f32 %v650, %v675
        %vm677 = vcmp.gt.f32.partialorder %v674, %v593
        %vm678 = vcmp.gt.f32.partialorder %v676, %v594
        %v679 = vsel %vm677, %v674, %v593
        %v680 = vsel %vm678, %v676, %v594
        %v681 = vsel %vm677, %v614, %v595
        %v682 = vsel %vm678, %v614, %v596
        %v683 = vsel %vm677, %v630, %v597
        %v684 = vsel %vm678, %v630, %v598
        %v685 = vsel %vm677, %v611, %v599
        %v686 = vsel %vm678, %v611, %v600
        %v687 = vsel %vm677, %v627, %v601
        %v688 = vsel %vm678, %v627, %v602
        %s689 = sadd.s32 %s173, 24
        %s690 = sld [smem:[#allocation6 + %s689]]
        %s691 = sadd.s32 %s173, 25
        %s692 = sld [smem:[#allocation6 + %s691]]
        %s693 = sadd.s32 %s173, 26
        %s694 = sld [smem:[#allocation6 + %s693]]
        %s695 = sadd.s32 %s173, 27
        %s696 = sld [smem:[#allocation6 + %s695]]
        %v697 = vstv %s694
        %v698 = vmin.f32 %v171, %v697
        %v699 = vmin.f32 %v172, %v697
        %v700 = vstv %s690
        %v701 = vmax.f32 %v171, %v700
        %v702 = vmax.f32 %v172, %v700
        %v705 = vrot.slane %v701, 6
        %v706 = vrot.slane %v702, 6
        %v709 = vsub.f32 %v698, %v705
        %v710 = vsub.f32 %v699, %v706
        %v711 = vmax.f32 %v709, 0.0
        %v712 = vmax.f32 %v710, 0.0
        %v713 = vstv %s696
        %v714 = vmin.f32 %v171, %v713
        %v715 = vmin.f32 %v172, %v713
        %v716 = vstv %s692
        %v717 = vmax.f32 %v171, %v716
        %v718 = vmax.f32 %v172, %v716
        %v721 = vrot.slane %v717, 6
        %v722 = vrot.slane %v718, 6
        %v725 = vsub.f32 %v714, %v721
        %v726 = vsub.f32 %v715, %v722
        %v727 = vmax.f32 %v725, 0.0
        %v728 = vmax.f32 %v726, 0.0
        %v731 = vrot.slane %v727, 1
        %v732 = vrot.slane %v728, 1
        %v735 = vmul.f32 %v711, %v731
        %v736 = vmul.f32 %v712, %v732
        %s737 = ssub.f32 %s694, %s690
        %s738 = ssub.f32 %s696, %s692
        %s739 = smul.f32 %s737, %s738
        %v740 = vstv %s739
        %v741 = vadd.f32 %v171, %v740
        %v742 = vadd.f32 %v172, %v740
        %v745 = vrot.slane %v735, 6
        %v746 = vrot.slane %v736, 6
        %v749 = vsub.f32 %v741, %v745
        %v750 = vsub.f32 %v742, %v746
        %v751 = vadd.f32 %v749, 1e-10
        %v752 = vadd.f32 %v750, 1e-10
        %v755 = vrot.slane %v751, 2
        %v756 = vrot.slane %v752, 2
        %v759 = vrcp.pop %v755
        %v760 = vmul.f32 %v735, %v759
        %v761 = vrcp.pop %v756
        %v762 = vmul.f32 %v736, %v761
        %vm763 = vcmp.gt.f32.partialorder %v760, %v679
        %vm764 = vcmp.gt.f32.partialorder %v762, %v680
        %v765 = vsel %vm763, %v760, %v679
        %v766 = vsel %vm764, %v762, %v680
        %v767 = vsel %vm763, %v700, %v681
        %v768 = vsel %vm764, %v700, %v682
        %v769 = vsel %vm763, %v716, %v683
        %v770 = vsel %vm764, %v716, %v684
        %v771 = vsel %vm763, %v697, %v685
        %v772 = vsel %vm764, %v697, %v686
        %v773 = vsel %vm763, %v713, %v687
        %v774 = vsel %vm764, %v713, %v688
        %s775 = sadd.s32 %s173, 28
        %s776 = sld [smem:[#allocation6 + %s775]]
        %s777 = sadd.s32 %s173, 29
        %s778 = sld [smem:[#allocation6 + %s777]]
        %s779 = sadd.s32 %s173, 30
        %s780 = sld [smem:[#allocation6 + %s779]]
        %s781 = sadd.s32 %s173, 31
        %s782 = sld [smem:[#allocation6 + %s781]]
        %v783 = vstv %s780
        %v784 = vmin.f32 %v171, %v783
        %v785 = vmin.f32 %v172, %v783
        %v786 = vstv %s776
        %v787 = vmax.f32 %v171, %v786
        %v788 = vmax.f32 %v172, %v786
        %v791 = vrot.slane %v787, 6
        %v792 = vrot.slane %v788, 6
        %v795 = vsub.f32 %v784, %v791
        %v796 = vsub.f32 %v785, %v792
        %v797 = vmax.f32 %v795, 0.0
        %v798 = vmax.f32 %v796, 0.0
        %v799 = vstv %s782
        %v800 = vmin.f32 %v171, %v799
        %v801 = vmin.f32 %v172, %v799
        %v802 = vstv %s778
        %v803 = vmax.f32 %v171, %v802
        %v804 = vmax.f32 %v172, %v802
        %v807 = vrot.slane %v803, 6
        %v808 = vrot.slane %v804, 6
        %v811 = vsub.f32 %v800, %v807
        %v812 = vsub.f32 %v801, %v808
        %v813 = vmax.f32 %v811, 0.0
        %v814 = vmax.f32 %v812, 0.0
        %v817 = vrot.slane %v813, 1
        %v818 = vrot.slane %v814, 1
        %v821 = vmul.f32 %v797, %v817
        %v822 = vmul.f32 %v798, %v818
        %s823 = ssub.f32 %s780, %s776
        %s824 = ssub.f32 %s782, %s778
        %s825 = smul.f32 %s823, %s824
        %v826 = vstv %s825
        %v827 = vadd.f32 %v171, %v826
        %v828 = vadd.f32 %v172, %v826
        %v831 = vrot.slane %v821, 6
        %v832 = vrot.slane %v822, 6
        %v835 = vsub.f32 %v827, %v831
        %v836 = vsub.f32 %v828, %v832
        %v837 = vadd.f32 %v835, 1e-10
        %v838 = vadd.f32 %v836, 1e-10
        %v841 = vrot.slane %v837, 2
        %v842 = vrot.slane %v838, 2
        %v845 = vrcp.pop %v841
        %v846 = vmul.f32 %v821, %v845
        %v847 = vrcp.pop %v842
        %v848 = vmul.f32 %v822, %v847
        %vm849 = vcmp.gt.f32.partialorder %v846, %v765
        %vm850 = vcmp.gt.f32.partialorder %v848, %v766
        %v851 = vsel %vm849, %v846, %v765
        %v852 = vsel %vm850, %v848, %v766
        %v853 = vsel %vm849, %v786, %v767
        %v854 = vsel %vm850, %v786, %v768
        %v855 = vsel %vm849, %v802, %v769
        %v856 = vsel %vm850, %v802, %v770
        %v857 = vsel %vm849, %v783, %v771
        %v858 = vsel %vm850, %v783, %v772
        %v859 = vsel %vm849, %v799, %v773
        %v860 = vsel %vm850, %v799, %v774
        %vm861 = vcmp.ge.f32.partialorder %v851, 0.35
        %vm862 = vcmp.ge.f32.partialorder %v852, 0.35
        %v863 = vsel %vm861, 1, 0
        %v864 = vsel %vm862, 1, 0
        %v865 = vcvt.s32.f32 %v863
        %v866 = vcvt.s32.f32 %v864
        %vm867 = vcmp.lt.f32.partialorder %v851, 0.1
        %vm868 = vcmp.lt.f32.partialorder %v852, 0.1
        %v869 = vsel %vm867, 1, 0
        %v870 = vsel %vm868, 1, 0
        %v871 = vcvt.s32.f32 %v869
        %v872 = vcvt.s32.f32 %v870
        %v875 = vrot.slane %v853, 2
        %v876 = vrot.slane %v854, 2
        %v881 = vrot.slane %v855, 1
        %v882 = vrot.slane %v856, 1
        %v887 = vrot.slane %v859, 7
        %v888 = vrot.slane %v860, 7
        %v893 = vrot.slane %v851, 6
        %v894 = vrot.slane %v852, 6
        %v899 = vrot.slane %v865, 5
        %v900 = vrot.slane %v866, 5
        %v905 = vrot.slane %v871, 4
        %v906 = vrot.slane %v872, 4
        %vm909 = vcmask 1040384
        %v910 = vsel %vm909, %v875, %v881
        %v911 = vsel %vm909, %v876, %v882
        %vm912 = vcmask 1041408
        %v913 = vsel %vm912, %v910, %v857
        %v914 = vsel %vm912, %v911, %v858
        %vm915 = vcmask 1042432
        %v916 = vsel %vm915, %v913, %v887
        %v917 = vsel %vm915, %v914, %v888
        %vm918 = vcmask 1043456
        %v919 = vsel %vm918, %v916, %v893
        %v920 = vsel %vm918, %v917, %v894
        %vm921 = vcmask 1044480
        %v922 = vsel %vm921, %v919, %v899
        %v923 = vsel %vm921, %v920, %v900
        %vm924 = vcmask 1045504
        %v925 = vsel %vm924, %v922, %v905
        %v926 = vsel %vm924, %v923, %v906
        %vm927 = vcmask 1046528
        %v928 = vsel %vm927, %v925, 0.0
        %v929 = vsel %vm927, %v926, 0.0
        %930 = vst [vmem:[%s168] sm:$0xff] %v928
        %931 = vst [vmem:[%s168 + $0x8] sm:$0xff] %v929
        %s932 = sand.u32 %s87, 1
        %s933 = scalar_lea.sflag [#allocation4], %s932
        %s934 = sand.u32 %s87, 1
        %s935 = smul.addr %s934, 16
        %s936 = scalar_lea.vmem [#allocation7], %s935
        // Predicated region
        $region37: #{tpu_custom_call.1} parent=27 // pred_check
          %p937 = pneg %p97
        $region38: #{tpu_custom_call.1} parent=27 // pred_check_branch
          %939 = sbr.rel (%p937) target = $region40
        $region39: #{tpu_custom_call.1} parent=27 // pred_region
          %s940 = smul.u32 2, %s23
          %s942 = ssub.s32 256, 256
          %943 = vsyncadd %s933, %s942
          %s944 = smul.addr %s22, 2
          %s945 = sadd.s32 %s940, %s944
          %s946 = smul.addr %s945, 128
          %s947 = scalar_lea.hbm %s2, %s946
          %s949 = sshll.u32 %s936, 4
          %s950 = int_to_ptr.vmem [resolvable:$true] %s949
          %952 = dma.vmem_to_hbm [thread:$0]  %s950, 256, %s947, %s933
        $region40: #{tpu_custom_call.1} parent=27 // pred_fallthru
          _
      $region28: #{tpu_custom_call.1} parent=5 // pred_fallthru
        _
      %p953 = scmp.le.s32.totalorder 2, %s13
      // Predicated region
      $region41: #{tpu_custom_call.1} parent=5 // pred_check
        %p954 = pneg %p953
      $region42: #{tpu_custom_call.1} parent=5 // pred_check_branch
        %956 = sbr.rel (%p954) target = $region44
      $region43: #{tpu_custom_call.1} parent=5 // pred_region
        %s957 = ssub.s32 %s13, 2
        // Predicated region
        $region45: #{tpu_custom_call.1} parent=43 // pred_check
          %p958 = pneg %p103
        $region46: #{tpu_custom_call.1} parent=43 // pred_check_branch
          %960 = sbr.rel (%p958) target = $region48
        $region47: #{tpu_custom_call.1} parent=43 // pred_region
          %s961 = sand.u32 %s88, 1
          %s962 = scalar_lea.sflag [#allocation4], %s961
          %s963 = sand.u32 %s88, 1
          %s964 = smul.addr %s963, 16
          %s965 = scalar_lea.vmem [#allocation7], %s964
          %966 = dma.done %s962, 256
        $region48: #{tpu_custom_call.1} parent=43 // pred_fallthru
          _
      $region44: #{tpu_custom_call.1} parent=5 // pred_fallthru
        _
    $region6: #{tpu_custom_call.1} parent=1 // loop_footer
      %s17 = sadd.s32 1, %s13
    $region7: #{tpu_custom_call.1} parent=1 // loop_footer_branch
      %12 = sbr.rel target = $region3
    $region8: #{tpu_custom_call.1} parent=1 // loop_exit
      _
    %967 = vsyncpa [#allocation3], 1
    %s968 = scalar_lea.sflag [#allocation3], 1
    %969 = vsyncpa %s968, 1
    %970 = vsyncpa [#allocation4], 1
    %s971 = scalar_lea.sflag [#allocation4], 1
    %972 = vsyncpa %s971, 1
    %973 = vsyncpa [#allocation5], 1
    %s974 = scalar_lea.sflag [#allocation5], 1
    %975 = vsyncpa %s974, 1

</llo_original>
